<compile_context>
chip_gen: v7x
topology: tpu7x:2x2x1
jax: 0.10.0
libtpu: 0.0.40
codegen_flags: <defaults>
</compile_context>

<pallas_src>
import functools

import jax
import jax.numpy as jnp
from jax import lax
from jax.experimental import pallas as pl
from jax.experimental.pallas import tpu as pltpu


def _round_up(n, m):
    return ((n + m - 1) // m) * m


def _vmem_bytes(shape):
    """Approx VMEM footprint of an f32 buffer with (8,128) tile padding."""
    rows = 1
    for s in shape[:-1]:
        rows *= int(s)
    return _round_up(max(rows, 1), 8) * _round_up(int(shape[-1]), 128) * 4


# --------------------------------------------------------------------------
# Fused kernel: (both directions x all layers) LSTM + pooling + MLP head
# --------------------------------------------------------------------------
def _make_rnnet_kernel(num_layers, T, Bp, W):
    """W = D * Hp, the concatenated (padded) hidden width; multiple of 128."""
    Gc = 4 * W
    unroll = T if T <= 32 else 8

    def kernel(*refs):
        idx = 0
        x_ref = refs[idx]; idx += 1                    # (T*Bp, D*F) cat input
        mask_ref = refs[idx]; idx += 1                 # (T*Bp, 1) pooling wts
        lstm_refs = refs[idx:idx + 3 * num_layers]; idx += 3 * num_layers
        (w1_ref, b1_ref, w2_ref, b2_ref,
         w3_ref, b3_ref) = refs[idx:idx + 6]; idx += 6
        out_ref = refs[idx]; idx += 1                  # (Bp, Cp)
        xg_sc = refs[idx]; idx += 1                    # VMEM (T*Bp, 4W)
        hseq_sc = refs[idx] if num_layers > 1 else None  # VMEM (T*Bp, W)

        def project_inputs(layer_in_2d, wih_ref, b_ref):
            # Hoisted x-projection for ALL timesteps and BOTH directions.
            xg_sc[...] = (
                jnp.dot(layer_in_2d, wih_ref[...],
                        preferred_element_type=jnp.float32) + b_ref[...])

        def lstm_gates(t, h, whh_ref):
            row = pl.multiple_of(t * Bp, Bp)
            gates = xg_sc[pl.ds(row, Bp), :] + jnp.dot(
                h, whh_ref[...], preferred_element_type=jnp.float32)
            # Gate-interleaved cat layout: 128-lane-aligned slices.
            i = jax.nn.sigmoid(gates[:, 0:W])
            f = jax.nn.sigmoid(gates[:, W:2 * W])
            g = jnp.tanh(gates[:, 2 * W:3 * W])
            o = jax.nn.sigmoid(gates[:, 3 * W:4 * W])
            return i, f, g, o, row

        zeros = jnp.zeros((Bp, W), jnp.float32)

        # Layers 0 .. L-2: keep the hidden sequence resident in VMEM.
        for l in range(num_layers - 1):
            wih_ref, whh_ref, b_ref = lstm_refs[3 * l:3 * l + 3]
            layer_in = x_ref[...] if l == 0 else hseq_sc[...]
            project_inputs(layer_in, wih_ref, b_ref)

            def step(t, carry, whh_ref=whh_ref):
                h, c = carry
                i, f, g, o, row = lstm_gates(t, h, whh_ref)
                c = f * c + i * g
                h = o * jnp.tanh(c)
                hseq_sc[pl.ds(row, Bp), :] = h
                return h, c

            lax.fori_loop(0, T, step, (zeros, zeros), unroll=unroll)

        # Last layer: fuse the sequence pooling into the step loop.
        l = num_layers - 1
        wih_ref, whh_ref, b_ref = lstm_refs[3 * l:3 * l + 3]
        layer_in = x_ref[...] if l == 0 else hseq_sc[...]
        project_inputs(layer_in, wih_ref, b_ref)

        def last_step(t, carry):
            h, c, acc = carry
            i, f, g, o, row = lstm_gates(t, h, whh_ref)
            c = f * c + i * g
            h = o * jnp.tanh(c)
            acc = acc + mask_ref[pl.ds(row, Bp), :] * h
            return h, c, acc

        _, _, pooled = lax.fori_loop(0, T, last_step, (zeros, zeros, zeros),
                                     unroll=unroll)

        # Fused MLP head epilogue (pooled already is the [fwd|rev] concat).
        # TODO(synk): dropout (training=True in reference) is identity here.
        h1 = jnp.tanh(
            jnp.dot(pooled, w1_ref[...], preferred_element_type=jnp.float32)
            + b1_ref[...])
        h2 = jnp.tanh(
            jnp.dot(h1, w2_ref[...], preferred_element_type=jnp.float32)
            + b2_ref[...])
        out_ref[...] = jax.nn.sigmoid(
            jnp.dot(h2, w3_ref[...], preferred_element_type=jnp.float32)
            + b3_ref[...])

    return kernel


def rnnet_fused_call(x, mask, lstm_w, mlp_w, *, T, Bp):
    """x: (T*Bp, D*F) cat input, mask: (T*Bp, 1). Returns (Bp, Cp)."""
    L = len(lstm_w)
    W = lstm_w[0][1].shape[0]          # whh_bd is (W, 4W)
    Gc = 4 * W
    Cp = mlp_w[4].shape[1]

    inputs = [x, mask]
    in_specs = [pl.BlockSpec(x.shape, lambda i: (0, 0)),
                pl.BlockSpec(mask.shape, lambda i: (0, 0))]
    for (wih, whh, b) in lstm_w:
        for a in (wih, whh, b):
            inputs.append(a)
            in_specs.append(pl.BlockSpec(a.shape, lambda i: (0, 0)))
    for a in mlp_w:
        inputs.append(a)
        in_specs.append(pl.BlockSpec(a.shape, lambda i: (0, 0)))

    scratch = [pltpu.VMEM((T * Bp, Gc), jnp.float32)]       # hoisted x-proj
    if L > 1:
        scratch.append(pltpu.VMEM((T * Bp, W), jnp.float32))  # inter-layer h

    # Explicit VMEM budget: double-buffered blocks + outputs + scratch.
    est = 2 * sum(_vmem_bytes(a.shape) for a in inputs)
    est += 2 * _vmem_bytes((Bp, Cp))
    est += _vmem_bytes((T * Bp, Gc))
    if L > 1:
        est += _vmem_bytes((T * Bp, W))
    vmem_limit = int(min(max(est + (8 << 20), 16 << 20), 64 << 20))

    return pl.pallas_call(
        _make_rnnet_kernel(L, T, Bp, W),
        out_shape=jax.ShapeDtypeStruct((Bp, Cp), jnp.float32),
        grid_spec=pltpu.PrefetchScalarGridSpec(
            num_scalar_prefetch=0,
            grid=(1,),
            in_specs=in_specs,
            out_specs=pl.BlockSpec((Bp, Cp), lambda i: (0, 0)),
            scratch_shapes=scratch,
        ),
        compiler_params=pltpu.CompilerParams(
            dimension_semantics=("arbitrary",),
            vmem_limit_bytes=vmem_limit),
    )(*inputs)


# --------------------------------------------------------------------------
# Host-side glue
# --------------------------------------------------------------------------
def _build_pool_mask(seq_lens, T, B, Bp, use_average):
    """(T*Bp, 1) f32 weights: mean-over-valid-steps or last-valid-step."""
    lens = jnp.maximum(seq_lens.astype(jnp.int32), 1)   # clamp: no div-by-0
    if Bp > B:
        lens = jnp.concatenate([lens, jnp.ones((Bp - B,), jnp.int32)])
    t_idx = jnp.arange(T, dtype=jnp.int32)[:, None]      # (T, 1)
    if use_average:
        m = ((t_idx < lens[None, :]).astype(jnp.float32)
             / lens[None, :].astype(jnp.float32))
    else:
        m = (t_idx == lens[None, :] - 1).astype(jnp.float32)
    return m.reshape(T * Bp, 1)


def rnnet_forward(prepped, feats, feats_rev, seq_lens, *,
                  use_average, bidirectional, class_num):
    """feats / feats_rev: (B, T, F) — same convention as the PyTorch module."""
    B, T, F = feats.shape
    Bp = _round_up(B, 8)
    D = 2 if bidirectional else 1

    def prep_x(f):
        x = jnp.transpose(f, (1, 0, 2)).astype(jnp.float32)   # (T, B, F)
        return jnp.pad(x, ((0, 0), (0, Bp - B), (0, 0)))       # (T, Bp, F)

    if bidirectional:
        x = jnp.concatenate([prep_x(feats), prep_x(feats_rev)], axis=-1)
    else:
        x = prep_x(feats)
    x = x.reshape(T * Bp, D * F)

    mask = _build_pool_mask(seq_lens, T, B, Bp, use_average)
    out = rnnet_fused_call(x, mask, prepped["lstm"], prepped["mlp"],
                           T=T, Bp=Bp)                          # (Bp, Cp)
    return out[:B, :class_num]


# --------------------------------------------------------------------------
# Parameters: PyTorch-layout init + one-time prep (block-diag / pad / fold)
# --------------------------------------------------------------------------
def _xavier_uniform(key, shape):
    fan_out, fan_in = shape
    limit = (6.0 / (fan_in + fan_out)) ** 0.5
    return jax.random.uniform(key, shape, jnp.float32, -limit, limit)


def init_params(key, feature_size, lstm_size, hidden_size, lstm_layers,
                class_num, bidirectional):
    def lstm_stack(key):
        layers = []
        for l in range(lstm_layers):
            in_dim = feature_size if l == 0 else lstm_size
            key, k1, k2, k3, k4 = jax.random.split(key, 5)
            scale = 1.0 / (lstm_size ** 0.5)
            layers.append((
                jax.random.uniform(k1, (4 * lstm_size, in_dim), jnp.float32,
                                   -scale, scale),
                jax.random.uniform(k2, (4 * lstm_size, lstm_size), jnp.float32,
                                   -scale, scale),
                jax.random.uniform(k3, (4 * lstm_size,), jnp.float32,
                                   -scale, scale),
                jax.random.uniform(k4, (4 * lstm_size,), jnp.float32,
                                   -scale, scale),
            ))
        return layers, key

    lstm1, key = lstm_stack(key)
    lstm2, key = lstm_stack(key)
    lin_in = 2 * lstm_size if bidirectional else lstm_size
    key, k1, k2, k3, kb1, kb2, kb3 = jax.random.split(key, 7)
    mlp = (
        _xavier_uniform(k1, (hidden_size, lin_in)),
        jax.random.uniform(kb1, (hidden_size,), jnp.float32, -0.1, 0.1),
        _xavier_uniform(k2, (hidden_size, hidden_size)),
        jax.random.uniform(kb2, (hidden_size,), jnp.float32, -0.1, 0.1),
        _xavier_uniform(k3, (class_num, hidden_size)),
        jax.random.uniform(kb3, (class_num,), jnp.float32, -0.1, 0.1),
    )
    return {"lstm1": lstm1, "lstm2": lstm2, "mlp": mlp}


def prepare_params(params, *, bidirectional):
    """One-time weight prep.

    Both directions' LSTM weights are packed into block-diagonal matrices with
    an interleaved gate layout [i_f i_r | f_f f_r | g_f g_r | o_f o_r], each
    direction zero-padded to Hp so the concatenated hidden width W = D*Hp is a
    multiple of 128 (lane-aligned gate slices).  Biases b_ih+b_hh are folded.
    MLP weights are transposed and zero-padded to 128-lane dims, with linear1
    rows remapped to the padded [fwd|rev] concat layout.
    """
    dirs = ["lstm1", "lstm2"] if bidirectional else ["lstm1"]
    D = len(dirs)
    L = len(params["lstm1"])
    F = params["lstm1"][0][0].shape[1]
    H = params["lstm1"][0][1].shape[1]
    Hp = _round_up(H, max(8, 128 // D))        # D*Hp is a multiple of 128
    W = D * Hp
    Gc = 4 * W

    lstm = []
    for l in range(L):
        in_real = F if l == 0 else H
        in_blk = F if l == 0 else Hp
        wih = jnp.zeros((D * in_blk, Gc), jnp.float32)
        whh = jnp.zeros((W, Gc), jnp.float32)
        bcat = jnp.zeros((1, Gc), jnp.float32)
        for d, name in enumerate(dirs):
            w_ih, w_hh, b_ih, b_hh = params[name][l]
            wih_t = jnp.transpose(w_ih)        # (in_real, 4H)
            whh_t = jnp.transpose(w_hh)        # (H, 4H)
            bsum = b_ih + b_hh
            for g in range(4):
                c0 = g * W + d * Hp
                wih = wih.at[d * in_blk:d * in_blk + in_real,
                             c0:c0 + H].set(wih_t[:, g * H:(g + 1) * H])
                whh = whh.at[d * Hp:d * Hp + H,
                             c0:c0 + H].set(whh_t[:, g * H:(g + 1) * H])
                bcat = bcat.at[0, c0:c0 + H].set(bsum[g * H:(g + 1) * H])
        lstm.append((wih, whh, bcat))

    w1, b1, w2, b2, w3, b3 = params["mlp"]
    hidden = w1.shape[0]
    C = w3.shape[0]
    Hhp = _round_up(hidden, 128)
    Cp = _round_up(C, 128)

    w1t = jnp.transpose(w1)                    # (D*H, hidden)
    w1p = jnp.zeros((W, Hhp), jnp.float32)
    for d in range(D):
        w1p = w1p.at[d * Hp:d * Hp + H, :hidden].set(w1t[d * H:(d + 1) * H, :])

    def pad2(a, r, c):
        return jnp.pad(a, ((0, r - a.shape[0]), (0, c - a.shape[1])))

    mlp = (
        w1p, pad2(b1.reshape(1, -1), 1, Hhp),
        pad2(jnp.transpose(w2), Hhp, Hhp), pad2(b2.reshape(1, -1), 1, Hhp),
        pad2(jnp.transpose(w3), Hhp, Cp), pad2(b3.reshape(1, -1), 1, Cp),
    )
    return {"lstm": lstm, "mlp": mlp}


# --------------------------------------------------------------------------
# Pure-JAX reference (for correctness check only)
# --------------------------------------------------------------------------
def _lstm_layer_ref(x_tbf, w_ih, w_hh, b_ih, b_hh):
    T, B, _ = x_tbf.shape
    H = w_hh.shape[1]

    def step(carry, x_t):
        h, c = carry
        gates = x_t @ w_ih.T + h @ w_hh.T + b_ih + b_hh
        i = jax.nn.sigmoid(gates[:, 0:H])
        f = jax.nn.sigmoid(gates[:, H:2 * H])
        g = jnp.tanh(gates[:, 2 * H:3 * H])
        o = jax.nn.sigmoid(gates[:, 3 * H:4 * H])
        c = f * c + i * g
        h = o * jnp.tanh(c)
        return (h, c), h

    z = jnp.zeros((B, H), jnp.float32)
    _, hs = lax.scan(step, (z, z), x_tbf)
    return hs                                      # (T, B, H)


def _pool_ref(outs_bth, seq_lens, use_average):
    B, T, _ = outs_bth.shape
    if use_average:
        mask = (jnp.arange(T)[None, :] < seq_lens[:, None]).astype(jnp.float32)
        return (jnp.sum(outs_bth * mask[:, :, None], axis=1)
                / seq_lens[:, None].astype(jnp.float32))
    return outs_bth[jnp.arange(B), seq_lens - 1]


def rnnet_reference(params, feats, feats_rev, seq_lens, *,
                    use_average, bidirectional):
    x = jnp.transpose(feats, (1, 0, 2)).astype(jnp.float32)
    h = x
    for lw in params["lstm1"]:
        h = _lstm_layer_ref(h, *lw)
    ff = _pool_ref(jnp.transpose(h, (1, 0, 2)), seq_lens, use_average)
    if bidirectional:
        xr = jnp.transpose(feats_rev, (1, 0, 2)).astype(jnp.float32)
        h = xr
        for lw in params["lstm2"]:
            h = _lstm_layer_ref(h, *lw)
        ffr = _pool_ref(jnp.transpose(h, (1, 0, 2)), seq_lens, use_average)
        ff = jnp.concatenate([ff, ffr], axis=1)
    w1, b1, w2, b2, w3, b3 = params["mlp"]
    h1 = jnp.tanh(ff @ w1.T + b1)
    h2 = jnp.tanh(h1 @ w2.T + b2)
    return jax.nn.sigmoid(h2 @ w3.T + b3)


# --------------------------------------------------------------------------
if __name__ == "__main__":
    B, T = 4, 8
    feature_size = 16       # embedding.get_embedding_length()
    lstm_size = 32
    hidden_size = 32
    lstm_layers = 1
    class_num = 4
    bidirectional = True
    use_average = True

    key = jax.random.PRNGKey(0)
    key, kf, kr = jax.random.split(key, 3)
    feats = jax.random.normal(kf, (B, T, feature_size), jnp.float32)
    feats_rev = jax.random.normal(kr, (B, T, feature_size), jnp.float32)
    seq_lens = jnp.array([8, 5, 3, 8], dtype=jnp.int32)

    params = init_params(key, feature_size, lstm_size, hidden_size,
                         lstm_layers, class_num, bidirectional)
    prepped = prepare_params(params, bidirectional=bidirectional)

    fwd = jax.jit(functools.partial(
        rnnet_forward, use_average=use_average,
        bidirectional=bidirectional, class_num=class_num))
    out = jax.block_until_ready(fwd(prepped, feats, feats_rev, seq_lens))

    ref = jax.block_until_ready(
        rnnet_reference(params, feats, feats_rev, seq_lens,
                        use_average=use_average, bidirectional=bidirectional))

    assert out.shape == (B, class_num)
    assert bool(jnp.all((out >= 0.0) & (out <= 1.0)))
    assert bool(jnp.allclose(out, ref, atol=1e-3, rtol=1e-3)), (
        "Pallas kernel output does not match pure-JAX reference")
    print("KERNEL_OK")
</pallas_src>

<mosaic_0001>
module attributes {stable_mosaic.version = 11 : i64} {
  func.func @kernel(%arg0: i32, %arg1: memref<64x32xf32, #tpu.memory_space<vmem>>, %arg2: memref<64x1xf32, #tpu.memory_space<vmem>>, %arg3: memref<32x512xf32, #tpu.memory_space<vmem>>, %arg4: memref<128x512xf32, #tpu.memory_space<vmem>>, %arg5: memref<1x512xf32, #tpu.memory_space<vmem>>, %arg6: memref<128x128xf32, #tpu.memory_space<vmem>>, %arg7: memref<1x128xf32, #tpu.memory_space<vmem>>, %arg8: memref<128x128xf32, #tpu.memory_space<vmem>>, %arg9: memref<1x128xf32, #tpu.memory_space<vmem>>, %arg10: memref<128x128xf32, #tpu.memory_space<vmem>>, %arg11: memref<1x128xf32, #tpu.memory_space<vmem>>, %arg12: memref<8x128xf32, #tpu.memory_space<vmem>>, %arg13: memref<64x512xf32, #tpu.memory_space<vmem>>) attributes {dimension_semantics = [#tpu.dimension_semantics<arbitrary>], iteration_bounds = array<i64: 1>, scalar_prefetch = 0 : i64, scratch_operands = 1 : i64, tpu.core_type = #tpu.core_type<tc>, window_params = [{pipeline_mode = #tpu.pipeline_mode<synchronous>, transform_indices = @transform_0, window_bounds = array<i64: 64, 32>}, {pipeline_mode = #tpu.pipeline_mode<synchronous>, transform_indices = @transform_1, window_bounds = array<i64: 64, 1>}, {pipeline_mode = #tpu.pipeline_mode<synchronous>, transform_indices = @transform_2, window_bounds = array<i64: 32, 512>}, {pipeline_mode = #tpu.pipeline_mode<synchronous>, transform_indices = @transform_3, window_bounds = array<i64: 128, 512>}, {pipeline_mode = #tpu.pipeline_mode<synchronous>, transform_indices = @transform_4, window_bounds = array<i64: 1, 512>}, {pipeline_mode = #tpu.pipeline_mode<synchronous>, transform_indices = @transform_5, window_bounds = array<i64: 128, 128>}, {pipeline_mode = #tpu.pipeline_mode<synchronous>, transform_indices = @transform_6, window_bounds = array<i64: 1, 128>}, {pipeline_mode = #tpu.pipeline_mode<synchronous>, transform_indices = @transform_7, window_bounds = array<i64: 128, 128>}, {pipeline_mode = #tpu.pipeline_mode<synchronous>, transform_indices = @transform_8, window_bounds = array<i64: 1, 128>}, {pipeline_mode = #tpu.pipeline_mode<synchronous>, transform_indices = @transform_9, window_bounds = array<i64: 128, 128>}, {pipeline_mode = #tpu.pipeline_mode<synchronous>, transform_indices = @transform_10, window_bounds = array<i64: 1, 128>}, {pipeline_mode = #tpu.pipeline_mode<synchronous>, transform_indices = @transform_11, window_bounds = array<i64: 8, 128>}]} {
    %cst = arith.constant 0.000000e+00 : f32
    %0 = vector.broadcast %cst : f32 to vector<8x128xf32>
    %c0 = arith.constant 0 : index
    %c0_0 = arith.constant 0 : index
    %1 = vector.load %arg1[%c0, %c0_0] : memref<64x32xf32, #tpu.memory_space<vmem>>, vector<64x32xf32>
    %c0_1 = arith.constant 0 : index
    %c0_2 = arith.constant 0 : index
    %2 = vector.load %arg3[%c0_1, %c0_2] : memref<32x512xf32, #tpu.memory_space<vmem>>, vector<32x512xf32>
    %cst_3 = arith.constant dense<0.000000e+00> : vector<64x512xf32>
    %3 = tpu.matmul %1, %2, %cst_3 {dimension_numbers = #tpu.dot_dimension_numbers<[1], [0], [0], [1], [0, 0, 1, 1], [], []>} : vector<64x32xf32>, vector<32x512xf32>, vector<64x512xf32> -> vector<64x512xf32>
    %c0_4 = arith.constant 0 : index
    %c0_5 = arith.constant 0 : index
    %4 = vector.load %arg5[%c0_4, %c0_5] : memref<1x512xf32, #tpu.memory_space<vmem>>, vector<1x512xf32>
    %5 = vector.broadcast %4 : vector<1x512xf32> to vector<64x512xf32>
    %6 = arith.addf %3, %5 : vector<64x512xf32>
    %c0_6 = arith.constant 0 : index
    %c0_7 = arith.constant 0 : index
    %7 = vector.load %arg13[%c0_6, %c0_7] : memref<64x512xf32, #tpu.memory_space<vmem>>, vector<64x512xf32>
    tpu.vector_store %arg13[%c0_6, %c0_7], %6 {strides = array<i32>} : memref<64x512xf32, #tpu.memory_space<vmem>>, vector<64x512xf32>,
    %c0_i32 = arith.constant 0 : i32
    %c8_i32 = arith.constant 8 : i32
    %8 = arith.muli %c0_i32, %c8_i32 : i32
    %9 = tpu.assume_multiple %8, 8 : i32
    %10 = arith.index_cast %9 : i32 to index
    %c0_8 = arith.constant 0 : index
    %11 = vector.load %arg13[%10, %c0_8] : memref<64x512xf32, #tpu.memory_space<vmem>>, vector<8x512xf32>
    %c0_9 = arith.constant 0 : index
    %c0_10 = arith.constant 0 : index
    %12 = vector.load %arg4[%c0_9, %c0_10] : memref<128x512xf32, #tpu.memory_space<vmem>>, vector<128x512xf32>
    %cst_11 = arith.constant dense<0.000000e+00> : vector<8x512xf32>
    %13 = tpu.matmul %0, %12, %cst_11 {dimension_numbers = #tpu.dot_dimension_numbers<[1], [0], [0], [1], [0, 0, 1, 1], [], []>} : vector<8x128xf32>, vector<128x512xf32>, vector<8x512xf32> -> vector<8x512xf32>
    %14 = arith.addf %11, %13 : vector<8x512xf32>
    %15 = vector.extract_strided_slice %14 {offsets = [0, 0], sizes = [8, 128], strides = [1, 1]} : vector<8x512xf32> to vector<8x128xf32>
    %16 = arith.negf %15 : vector<8x128xf32>
    %17 = math.exp %16 : vector<8x128xf32>
    %cst_12 = arith.constant 1.000000e+00 : f32
    %18 = vector.broadcast %cst_12 : f32 to vector<8x128xf32>
    %19 = arith.addf %18, %17 : vector<8x128xf32>
    %20 = arith.divf %18, %19 : vector<8x128xf32>
    %21 = vector.extract_strided_slice %14 {offsets = [0, 128], sizes = [8, 128], strides = [1, 1]} : vector<8x512xf32> to vector<8x128xf32>
    %22 = arith.negf %21 : vector<8x128xf32>
    %23 = math.exp %22 : vector<8x128xf32>
    %cst_13 = arith.constant 1.000000e+00 : f32
    %24 = vector.broadcast %cst_13 : f32 to vector<8x128xf32>
    %25 = arith.addf %24, %23 : vector<8x128xf32>
    %26 = arith.divf %24, %25 : vector<8x128xf32>
    %27 = vector.extract_strided_slice %14 {offsets = [0, 256], sizes = [8, 128], strides = [1, 1]} : vector<8x512xf32> to vector<8x128xf32>
    %28 = math.tanh %27 : vector<8x128xf32>
    %29 = vector.extract_strided_slice %14 {offsets = [0, 384], sizes = [8, 128], strides = [1, 1]} : vector<8x512xf32> to vector<8x128xf32>
    %30 = arith.negf %29 : vector<8x128xf32>
    %31 = math.exp %30 : vector<8x128xf32>
    %cst_14 = arith.constant 1.000000e+00 : f32
    %32 = vector.broadcast %cst_14 : f32 to vector<8x128xf32>
    %33 = arith.addf %32, %31 : vector<8x128xf32>
    %34 = arith.divf %32, %33 : vector<8x128xf32>
    %35 = arith.mulf %26, %0 : vector<8x128xf32>
    %36 = arith.mulf %20, %28 : vector<8x128xf32>
    %37 = arith.addf %35, %36 : vector<8x128xf32>
    %38 = math.tanh %37 : vector<8x128xf32>
    %39 = arith.mulf %34, %38 : vector<8x128xf32>
    %40 = arith.index_cast %9 : i32 to index
    %c0_15 = arith.constant 0 : index
    %41 = vector.load %arg2[%40, %c0_15] : memref<64x1xf32, #tpu.memory_space<vmem>>, vector<8x1xf32>
    %42 = vector.broadcast %41 : vector<8x1xf32> to vector<8x128xf32>
    %43 = arith.mulf %42, %39 : vector<8x128xf32>
    %44 = arith.addf %0, %43 : vector<8x128xf32>
    %c1_i32 = arith.constant 1 : i32
    %c8_i32_16 = arith.constant 8 : i32
    %45 = arith.muli %c1_i32, %c8_i32_16 : i32
    %46 = tpu.assume_multiple %45, 8 : i32
    %47 = arith.index_cast %46 : i32 to index
    %c0_17 = arith.constant 0 : index
    %48 = vector.load %arg13[%47, %c0_17] : memref<64x512xf32, #tpu.memory_space<vmem>>, vector<8x512xf32>
    %c0_18 = arith.constant 0 : index
    %c0_19 = arith.constant 0 : index
    %49 = vector.load %arg4[%c0_18, %c0_19] : memref<128x512xf32, #tpu.memory_space<vmem>>, vector<128x512xf32>
    %cst_20 = arith.constant dense<0.000000e+00> : vector<8x512xf32>
    %50 = tpu.matmul %39, %49, %cst_20 {dimension_numbers = #tpu.dot_dimension_numbers<[1], [0], [0], [1], [0, 0, 1, 1], [], []>} : vector<8x128xf32>, vector<128x512xf32>, vector<8x512xf32> -> vector<8x512xf32>
    %51 = arith.addf %48, %50 : vector<8x512xf32>
    %52 = vector.extract_strided_slice %51 {offsets = [0, 0], sizes = [8, 128], strides = [1, 1]} : vector<8x512xf32> to vector<8x128xf32>
    %53 = arith.negf %52 : vector<8x128xf32>
    %54 = math.exp %53 : vector<8x128xf32>
    %cst_21 = arith.constant 1.000000e+00 : f32
    %55 = vector.broadcast %cst_21 : f32 to vector<8x128xf32>
    %56 = arith.addf %55, %54 : vector<8x128xf32>
    %57 = arith.divf %55, %56 : vector<8x128xf32>
    %58 = vector.extract_strided_slice %51 {offsets = [0, 128], sizes = [8, 128], strides = [1, 1]} : vector<8x512xf32> to vector<8x128xf32>
    %59 = arith.negf %58 : vector<8x128xf32>
    %60 = math.exp %59 : vector<8x128xf32>
    %cst_22 = arith.constant 1.000000e+00 : f32
    %61 = vector.broadcast %cst_22 : f32 to vector<8x128xf32>
    %62 = arith.addf %61, %60 : vector<8x128xf32>
    %63 = arith.divf %61, %62 : vector<8x128xf32>
    %64 = vector.extract_strided_slice %51 {offsets = [0, 256], sizes = [8, 128], strides = [1, 1]} : vector<8x512xf32> to vector<8x128xf32>
    %65 = math.tanh %64 : vector<8x128xf32>
    %66 = vector.extract_strided_slice %51 {offsets = [0, 384], sizes = [8, 128], strides = [1, 1]} : vector<8x512xf32> to vector<8x128xf32>
    %67 = arith.negf %66 : vector<8x128xf32>
    %68 = math.exp %67 : vector<8x128xf32>
    %cst_23 = arith.constant 1.000000e+00 : f32
    %69 = vector.broadcast %cst_23 : f32 to vector<8x128xf32>
    %70 = arith.addf %69, %68 : vector<8x128xf32>
    %71 = arith.divf %69, %70 : vector<8x128xf32>
    %72 = arith.mulf %63, %37 : vector<8x128xf32>
    %73 = arith.mulf %57, %65 : vector<8x128xf32>
    %74 = arith.addf %72, %73 : vector<8x128xf32>
    %75 = math.tanh %74 : vector<8x128xf32>
    %76 = arith.mulf %71, %75 : vector<8x128xf32>
    %77 = arith.index_cast %46 : i32 to index
    %c0_24 = arith.constant 0 : index
    %78 = vector.load %arg2[%77, %c0_24] : memref<64x1xf32, #tpu.memory_space<vmem>>, vector<8x1xf32>
    %79 = vector.broadcast %78 : vector<8x1xf32> to vector<8x128xf32>
    %80 = arith.mulf %79, %76 : vector<8x128xf32>
    %81 = arith.addf %44, %80 : vector<8x128xf32>
    %c2_i32 = arith.constant 2 : i32
    %c8_i32_25 = arith.constant 8 : i32
    %82 = arith.muli %c2_i32, %c8_i32_25 : i32
    %83 = tpu.assume_multiple %82, 8 : i32
    %84 = arith.index_cast %83 : i32 to index
    %c0_26 = arith.constant 0 : index
    %85 = vector.load %arg13[%84, %c0_26] : memref<64x512xf32, #tpu.memory_space<vmem>>, vector<8x512xf32>
    %c0_27 = arith.constant 0 : index
    %c0_28 = arith.constant 0 : index
    %86 = vector.load %arg4[%c0_27, %c0_28] : memref<128x512xf32, #tpu.memory_space<vmem>>, vector<128x512xf32>
    %cst_29 = arith.constant dense<0.000000e+00> : vector<8x512xf32>
    %87 = tpu.matmul %76, %86, %cst_29 {dimension_numbers = #tpu.dot_dimension_numbers<[1], [0], [0], [1], [0, 0, 1, 1], [], []>} : vector<8x128xf32>, vector<128x512xf32>, vector<8x512xf32> -> vector<8x512xf32>
    %88 = arith.addf %85, %87 : vector<8x512xf32>
    %89 = vector.extract_strided_slice %88 {offsets = [0, 0], sizes = [8, 128], strides = [1, 1]} : vector<8x512xf32> to vector<8x128xf32>
    %90 = arith.negf %89 : vector<8x128xf32>
    %91 = math.exp %90 : vector<8x128xf32>
    %cst_30 = arith.constant 1.000000e+00 : f32
    %92 = vector.broadcast %cst_30 : f32 to vector<8x128xf32>
    %93 = arith.addf %92, %91 : vector<8x128xf32>
    %94 = arith.divf %92, %93 : vector<8x128xf32>
    %95 = vector.extract_strided_slice %88 {offsets = [0, 128], sizes = [8, 128], strides = [1, 1]} : vector<8x512xf32> to vector<8x128xf32>
    %96 = arith.negf %95 : vector<8x128xf32>
    %97 = math.exp %96 : vector<8x128xf32>
    %cst_31 = arith.constant 1.000000e+00 : f32
    %98 = vector.broadcast %cst_31 : f32 to vector<8x128xf32>
    %99 = arith.addf %98, %97 : vector<8x128xf32>
    %100 = arith.divf %98, %99 : vector<8x128xf32>
    %101 = vector.extract_strided_slice %88 {offsets = [0, 256], sizes = [8, 128], strides = [1, 1]} : vector<8x512xf32> to vector<8x128xf32>
    %102 = math.tanh %101 : vector<8x128xf32>
    %103 = vector.extract_strided_slice %88 {offsets = [0, 384], sizes = [8, 128], strides = [1, 1]} : vector<8x512xf32> to vector<8x128xf32>
    %104 = arith.negf %103 : vector<8x128xf32>
    %105 = math.exp %104 : vector<8x128xf32>
    %cst_32 = arith.constant 1.000000e+00 : f32
    %106 = vector.broadcast %cst_32 : f32 to vector<8x128xf32>
    %107 = arith.addf %106, %105 : vector<8x128xf32>
    %108 = arith.divf %106, %107 : vector<8x128xf32>
    %109 = arith.mulf %100, %74 : vector<8x128xf32>
    %110 = arith.mulf %94, %102 : vector<8x128xf32>
    %111 = arith.addf %109, %110 : vector<8x128xf32>
    %112 = math.tanh %111 : vector<8x128xf32>
    %113 = arith.mulf %108, %112 : vector<8x128xf32>
    %114 = arith.index_cast %83 : i32 to index
    %c0_33 = arith.constant 0 : index
    %115 = vector.load %arg2[%114, %c0_33] : memref<64x1xf32, #tpu.memory_space<vmem>>, vector<8x1xf32>
    %116 = vector.broadcast %115 : vector<8x1xf32> to vector<8x128xf32>
    %117 = arith.mulf %116, %113 : vector<8x128xf32>
    %118 = arith.addf %81, %117 : vector<8x128xf32>
    %c3_i32 = arith.constant 3 : i32
    %c8_i32_34 = arith.constant 8 : i32
    %119 = arith.muli %c3_i32, %c8_i32_34 : i32
    %120 = tpu.assume_multiple %119, 8 : i32
    %121 = arith.index_cast %120 : i32 to index
    %c0_35 = arith.constant 0 : index
    %122 = vector.load %arg13[%121, %c0_35] : memref<64x512xf32, #tpu.memory_space<vmem>>, vector<8x512xf32>
    %c0_36 = arith.constant 0 : index
    %c0_37 = arith.constant 0 : index
    %123 = vector.load %arg4[%c0_36, %c0_37] : memref<128x512xf32, #tpu.memory_space<vmem>>, vector<128x512xf32>
    %cst_38 = arith.constant dense<0.000000e+00> : vector<8x512xf32>
    %124 = tpu.matmul %113, %123, %cst_38 {dimension_numbers = #tpu.dot_dimension_numbers<[1], [0], [0], [1], [0, 0, 1, 1], [], []>} : vector<8x128xf32>, vector<128x512xf32>, vector<8x512xf32> -> vector<8x512xf32>
    %125 = arith.addf %122, %124 : vector<8x512xf32>
    %126 = vector.extract_strided_slice %125 {offsets = [0, 0], sizes = [8, 128], strides = [1, 1]} : vector<8x512xf32> to vector<8x128xf32>
    %127 = arith.negf %126 : vector<8x128xf32>
    %128 = math.exp %127 : vector<8x128xf32>
    %cst_39 = arith.constant 1.000000e+00 : f32
    %129 = vector.broadcast %cst_39 : f32 to vector<8x128xf32>
    %130 = arith.addf %129, %128 : vector<8x128xf32>
    %131 = arith.divf %129, %130 : vector<8x128xf32>
    %132 = vector.extract_strided_slice %125 {offsets = [0, 128], sizes = [8, 128], strides = [1, 1]} : vector<8x512xf32> to vector<8x128xf32>
    %133 = arith.negf %132 : vector<8x128xf32>
    %134 = math.exp %133 : vector<8x128xf32>
    %cst_40 = arith.constant 1.000000e+00 : f32
    %135 = vector.broadcast %cst_40 : f32 to vector<8x128xf32>
    %136 = arith.addf %135, %134 : vector<8x128xf32>
    %137 = arith.divf %135, %136 : vector<8x128xf32>
    %138 = vector.extract_strided_slice %125 {offsets = [0, 256], sizes = [8, 128], strides = [1, 1]} : vector<8x512xf32> to vector<8x128xf32>
    %139 = math.tanh %138 : vector<8x128xf32>
    %140 = vector.extract_strided_slice %125 {offsets = [0, 384], sizes = [8, 128], strides = [1, 1]} : vector<8x512xf32> to vector<8x128xf32>
    %141 = arith.negf %140 : vector<8x128xf32>
    %142 = math.exp %141 : vector<8x128xf32>
    %cst_41 = arith.constant 1.000000e+00 : f32
    %143 = vector.broadcast %cst_41 : f32 to vector<8x128xf32>
    %144 = arith.addf %143, %142 : vector<8x128xf32>
    %145 = arith.divf %143, %144 : vector<8x128xf32>
    %146 = arith.mulf %137, %111 : vector<8x128xf32>
    %147 = arith.mulf %131, %139 : vector<8x128xf32>
    %148 = arith.addf %146, %147 : vector<8x128xf32>
    %149 = math.tanh %148 : vector<8x128xf32>
    %150 = arith.mulf %145, %149 : vector<8x128xf32>
    %151 = arith.index_cast %120 : i32 to index
    %c0_42 = arith.constant 0 : index
    %152 = vector.load %arg2[%151, %c0_42] : memref<64x1xf32, #tpu.memory_space<vmem>>, vector<8x1xf32>
    %153 = vector.broadcast %152 : vector<8x1xf32> to vector<8x128xf32>
    %154 = arith.mulf %153, %150 : vector<8x128xf32>
    %155 = arith.addf %118, %154 : vector<8x128xf32>
    %c4_i32 = arith.constant 4 : i32
    %c8_i32_43 = arith.constant 8 : i32
    %156 = arith.muli %c4_i32, %c8_i32_43 : i32
    %157 = tpu.assume_multiple %156, 8 : i32
    %158 = arith.index_cast %157 : i32 to index
    %c0_44 = arith.constant 0 : index
    %159 = vector.load %arg13[%158, %c0_44] : memref<64x512xf32, #tpu.memory_space<vmem>>, vector<8x512xf32>
    %c0_45 = arith.constant 0 : index
    %c0_46 = arith.constant 0 : index
    %160 = vector.load %arg4[%c0_45, %c0_46] : memref<128x512xf32, #tpu.memory_space<vmem>>, vector<128x512xf32>
    %cst_47 = arith.constant dense<0.000000e+00> : vector<8x512xf32>
    %161 = tpu.matmul %150, %160, %cst_47 {dimension_numbers = #tpu.dot_dimension_numbers<[1], [0], [0], [1], [0, 0, 1, 1], [], []>} : vector<8x128xf32>, vector<128x512xf32>, vector<8x512xf32> -> vector<8x512xf32>
    %162 = arith.addf %159, %161 : vector<8x512xf32>
    %163 = vector.extract_strided_slice %162 {offsets = [0, 0], sizes = [8, 128], strides = [1, 1]} : vector<8x512xf32> to vector<8x128xf32>
    %164 = arith.negf %163 : vector<8x128xf32>
    %165 = math.exp %164 : vector<8x128xf32>
    %cst_48 = arith.constant 1.000000e+00 : f32
    %166 = vector.broadcast %cst_48 : f32 to vector<8x128xf32>
    %167 = arith.addf %166, %165 : vector<8x128xf32>
    %168 = arith.divf %166, %167 : vector<8x128xf32>
    %169 = vector.extract_strided_slice %162 {offsets = [0, 128], sizes = [8, 128], strides = [1, 1]} : vector<8x512xf32> to vector<8x128xf32>
    %170 = arith.negf %169 : vector<8x128xf32>
    %171 = math.exp %170 : vector<8x128xf32>
    %cst_49 = arith.constant 1.000000e+00 : f32
    %172 = vector.broadcast %cst_49 : f32 to vector<8x128xf32>
    %173 = arith.addf %172, %171 : vector<8x128xf32>
    %174 = arith.divf %172, %173 : vector<8x128xf32>
    %175 = vector.extract_strided_slice %162 {offsets = [0, 256], sizes = [8, 128], strides = [1, 1]} : vector<8x512xf32> to vector<8x128xf32>
    %176 = math.tanh %175 : vector<8x128xf32>
    %177 = vector.extract_strided_slice %162 {offsets = [0, 384], sizes = [8, 128], strides = [1, 1]} : vector<8x512xf32> to vector<8x128xf32>
    %178 = arith.negf %177 : vector<8x128xf32>
    %179 = math.exp %178 : vector<8x128xf32>
    %cst_50 = arith.constant 1.000000e+00 : f32
    %180 = vector.broadcast %cst_50 : f32 to vector<8x128xf32>
    %181 = arith.addf %180, %179 : vector<8x128xf32>
    %182 = arith.divf %180, %181 : vector<8x128xf32>
    %183 = arith.mulf %174, %148 : vector<8x128xf32>
    %184 = arith.mulf %168, %176 : vector<8x128xf32>
    %185 = arith.addf %183, %184 : vector<8x128xf32>
    %186 = math.tanh %185 : vector<8x128xf32>
    %187 = arith.mulf %182, %186 : vector<8x128xf32>
    %188 = arith.index_cast %157 : i32 to index
    %c0_51 = arith.constant 0 : index
    %189 = vector.load %arg2[%188, %c0_51] : memref<64x1xf32, #tpu.memory_space<vmem>>, vector<8x1xf32>
    %190 = vector.broadcast %189 : vector<8x1xf32> to vector<8x128xf32>
    %191 = arith.mulf %190, %187 : vector<8x128xf32>
    %192 = arith.addf %155, %191 : vector<8x128xf32>
    %c5_i32 = arith.constant 5 : i32
    %c8_i32_52 = arith.constant 8 : i32
    %193 = arith.muli %c5_i32, %c8_i32_52 : i32
    %194 = tpu.assume_multiple %193, 8 : i32
    %195 = arith.index_cast %194 : i32 to index
    %c0_53 = arith.constant 0 : index
    %196 = vector.load %arg13[%195, %c0_53] : memref<64x512xf32, #tpu.memory_space<vmem>>, vector<8x512xf32>
    %c0_54 = arith.constant 0 : index
    %c0_55 = arith.constant 0 : index
    %197 = vector.load %arg4[%c0_54, %c0_55] : memref<128x512xf32, #tpu.memory_space<vmem>>, vector<128x512xf32>
    %cst_56 = arith.constant dense<0.000000e+00> : vector<8x512xf32>
    %198 = tpu.matmul %187, %197, %cst_56 {dimension_numbers = #tpu.dot_dimension_numbers<[1], [0], [0], [1], [0, 0, 1, 1], [], []>} : vector<8x128xf32>, vector<128x512xf32>, vector<8x512xf32> -> vector<8x512xf32>
    %199 = arith.addf %196, %198 : vector<8x512xf32>
    %200 = vector.extract_strided_slice %199 {offsets = [0, 0], sizes = [8, 128], strides = [1, 1]} : vector<8x512xf32> to vector<8x128xf32>
    %201 = arith.negf %200 : vector<8x128xf32>
    %202 = math.exp %201 : vector<8x128xf32>
    %cst_57 = arith.constant 1.000000e+00 : f32
    %203 = vector.broadcast %cst_57 : f32 to vector<8x128xf32>
    %204 = arith.addf %203, %202 : vector<8x128xf32>
    %205 = arith.divf %203, %204 : vector<8x128xf32>
    %206 = vector.extract_strided_slice %199 {offsets = [0, 128], sizes = [8, 128], strides = [1, 1]} : vector<8x512xf32> to vector<8x128xf32>
    %207 = arith.negf %206 : vector<8x128xf32>
    %208 = math.exp %207 : vector<8x128xf32>
    %cst_58 = arith.constant 1.000000e+00 : f32
    %209 = vector.broadcast %cst_58 : f32 to vector<8x128xf32>
    %210 = arith.addf %209, %208 : vector<8x128xf32>
    %211 = arith.divf %209, %210 : vector<8x128xf32>
    %212 = vector.extract_strided_slice %199 {offsets = [0, 256], sizes = [8, 128], strides = [1, 1]} : vector<8x512xf32> to vector<8x128xf32>
    %213 = math.tanh %212 : vector<8x128xf32>
    %214 = vector.extract_strided_slice %199 {offsets = [0, 384], sizes = [8, 128], strides = [1, 1]} : vector<8x512xf32> to vector<8x128xf32>
    %215 = arith.negf %214 : vector<8x128xf32>
    %216 = math.exp %215 : vector<8x128xf32>
    %cst_59 = arith.constant 1.000000e+00 : f32
    %217 = vector.broadcast %cst_59 : f32 to vector<8x128xf32>
    %218 = arith.addf %217, %216 : vector<8x128xf32>
    %219 = arith.divf %217, %218 : vector<8x128xf32>
    %220 = arith.mulf %211, %185 : vector<8x128xf32>
    %221 = arith.mulf %205, %213 : vector<8x128xf32>
    %222 = arith.addf %220, %221 : vector<8x128xf32>
    %223 = math.tanh %222 : vector<8x128xf32>
    %224 = arith.mulf %219, %223 : vector<8x128xf32>
    %225 = arith.index_cast %194 : i32 to index
    %c0_60 = arith.constant 0 : index
    %226 = vector.load %arg2[%225, %c0_60] : memref<64x1xf32, #tpu.memory_space<vmem>>, vector<8x1xf32>
    %227 = vector.broadcast %226 : vector<8x1xf32> to vector<8x128xf32>
    %228 = arith.mulf %227, %224 : vector<8x128xf32>
    %229 = arith.addf %192, %228 : vector<8x128xf32>
    %c6_i32 = arith.constant 6 : i32
    %c8_i32_61 = arith.constant 8 : i32
    %230 = arith.muli %c6_i32, %c8_i32_61 : i32
    %231 = tpu.assume_multiple %230, 8 : i32
    %232 = arith.index_cast %231 : i32 to index
    %c0_62 = arith.constant 0 : index
    %233 = vector.load %arg13[%232, %c0_62] : memref<64x512xf32, #tpu.memory_space<vmem>>, vector<8x512xf32>
    %c0_63 = arith.constant 0 : index
    %c0_64 = arith.constant 0 : index
    %234 = vector.load %arg4[%c0_63, %c0_64] : memref<128x512xf32, #tpu.memory_space<vmem>>, vector<128x512xf32>
    %cst_65 = arith.constant dense<0.000000e+00> : vector<8x512xf32>
    %235 = tpu.matmul %224, %234, %cst_65 {dimension_numbers = #tpu.dot_dimension_numbers<[1], [0], [0], [1], [0, 0, 1, 1], [], []>} : vector<8x128xf32>, vector<128x512xf32>, vector<8x512xf32> -> vector<8x512xf32>
    %236 = arith.addf %233, %235 : vector<8x512xf32>
    %237 = vector.extract_strided_slice %236 {offsets = [0, 0], sizes = [8, 128], strides = [1, 1]} : vector<8x512xf32> to vector<8x128xf32>
    %238 = arith.negf %237 : vector<8x128xf32>
    %239 = math.exp %238 : vector<8x128xf32>
    %cst_66 = arith.constant 1.000000e+00 : f32
    %240 = vector.broadcast %cst_66 : f32 to vector<8x128xf32>
    %241 = arith.addf %240, %239 : vector<8x128xf32>
    %242 = arith.divf %240, %241 : vector<8x128xf32>
    %243 = vector.extract_strided_slice %236 {offsets = [0, 128], sizes = [8, 128], strides = [1, 1]} : vector<8x512xf32> to vector<8x128xf32>
    %244 = arith.negf %243 : vector<8x128xf32>
    %245 = math.exp %244 : vector<8x128xf32>
    %cst_67 = arith.constant 1.000000e+00 : f32
    %246 = vector.broadcast %cst_67 : f32 to vector<8x128xf32>
    %247 = arith.addf %246, %245 : vector<8x128xf32>
    %248 = arith.divf %246, %247 : vector<8x128xf32>
    %249 = vector.extract_strided_slice %236 {offsets = [0, 256], sizes = [8, 128], strides = [1, 1]} : vector<8x512xf32> to vector<8x128xf32>
    %250 = math.tanh %249 : vector<8x128xf32>
    %251 = vector.extract_strided_slice %236 {offsets = [0, 384], sizes = [8, 128], strides = [1, 1]} : vector<8x512xf32> to vector<8x128xf32>
    %252 = arith.negf %251 : vector<8x128xf32>
    %253 = math.exp %252 : vector<8x128xf32>
    %cst_68 = arith.constant 1.000000e+00 : f32
    %254 = vector.broadcast %cst_68 : f32 to vector<8x128xf32>
    %255 = arith.addf %254, %253 : vector<8x128xf32>
    %256 = arith.divf %254, %255 : vector<8x128xf32>
    %257 = arith.mulf %248, %222 : vector<8x128xf32>
    %258 = arith.mulf %242, %250 : vector<8x128xf32>
    %259 = arith.addf %257, %258 : vector<8x128xf32>
    %260 = math.tanh %259 : vector<8x128xf32>
    %261 = arith.mulf %256, %260 : vector<8x128xf32>
    %262 = arith.index_cast %231 : i32 to index
    %c0_69 = arith.constant 0 : index
    %263 = vector.load %arg2[%262, %c0_69] : memref<64x1xf32, #tpu.memory_space<vmem>>, vector<8x1xf32>
    %264 = vector.broadcast %263 : vector<8x1xf32> to vector<8x128xf32>
    %265 = arith.mulf %264, %261 : vector<8x128xf32>
    %266 = arith.addf %229, %265 : vector<8x128xf32>
    %c7_i32 = arith.constant 7 : i32
    %c8_i32_70 = arith.constant 8 : i32
    %267 = arith.muli %c7_i32, %c8_i32_70 : i32
    %268 = tpu.assume_multiple %267, 8 : i32
    %269 = arith.index_cast %268 : i32 to index
    %c0_71 = arith.constant 0 : index
    %270 = vector.load %arg13[%269, %c0_71] : memref<64x512xf32, #tpu.memory_space<vmem>>, vector<8x512xf32>
    %c0_72 = arith.constant 0 : index
    %c0_73 = arith.constant 0 : index
    %271 = vector.load %arg4[%c0_72, %c0_73] : memref<128x512xf32, #tpu.memory_space<vmem>>, vector<128x512xf32>
    %cst_74 = arith.constant dense<0.000000e+00> : vector<8x512xf32>
    %272 = tpu.matmul %261, %271, %cst_74 {dimension_numbers = #tpu.dot_dimension_numbers<[1], [0], [0], [1], [0, 0, 1, 1], [], []>} : vector<8x128xf32>, vector<128x512xf32>, vector<8x512xf32> -> vector<8x512xf32>
    %273 = arith.addf %270, %272 : vector<8x512xf32>
    %274 = vector.extract_strided_slice %273 {offsets = [0, 0], sizes = [8, 128], strides = [1, 1]} : vector<8x512xf32> to vector<8x128xf32>
    %275 = arith.negf %274 : vector<8x128xf32>
    %276 = math.exp %275 : vector<8x128xf32>
    %cst_75 = arith.constant 1.000000e+00 : f32
    %277 = vector.broadcast %cst_75 : f32 to vector<8x128xf32>
    %278 = arith.addf %277, %276 : vector<8x128xf32>
    %279 = arith.divf %277, %278 : vector<8x128xf32>
    %280 = vector.extract_strided_slice %273 {offsets = [0, 128], sizes = [8, 128], strides = [1, 1]} : vector<8x512xf32> to vector<8x128xf32>
    %281 = arith.negf %280 : vector<8x128xf32>
    %282 = math.exp %281 : vector<8x128xf32>
    %cst_76 = arith.constant 1.000000e+00 : f32
    %283 = vector.broadcast %cst_76 : f32 to vector<8x128xf32>
    %284 = arith.addf %283, %282 : vector<8x128xf32>
    %285 = arith.divf %283, %284 : vector<8x128xf32>
    %286 = vector.extract_strided_slice %273 {offsets = [0, 256], sizes = [8, 128], strides = [1, 1]} : vector<8x512xf32> to vector<8x128xf32>
    %287 = math.tanh %286 : vector<8x128xf32>
    %288 = vector.extract_strided_slice %273 {offsets = [0, 384], sizes = [8, 128], strides = [1, 1]} : vector<8x512xf32> to vector<8x128xf32>
    %289 = arith.negf %288 : vector<8x128xf32>
    %290 = math.exp %289 : vector<8x128xf32>
    %cst_77 = arith.constant 1.000000e+00 : f32
    %291 = vector.broadcast %cst_77 : f32 to vector<8x128xf32>
    %292 = arith.addf %291, %290 : vector<8x128xf32>
    %293 = arith.divf %291, %292 : vector<8x128xf32>
    %294 = arith.mulf %285, %259 : vector<8x128xf32>
    %295 = arith.mulf %279, %287 : vector<8x128xf32>
    %296 = arith.addf %294, %295 : vector<8x128xf32>
    %297 = math.tanh %296 : vector<8x128xf32>
    %298 = arith.mulf %293, %297 : vector<8x128xf32>
    %299 = arith.index_cast %268 : i32 to index
    %c0_78 = arith.constant 0 : index
    %300 = vector.load %arg2[%299, %c0_78] : memref<64x1xf32, #tpu.memory_space<vmem>>, vector<8x1xf32>
    %301 = vector.broadcast %300 : vector<8x1xf32> to vector<8x128xf32>
    %302 = arith.mulf %301, %298 : vector<8x128xf32>
    %303 = arith.addf %266, %302 : vector<8x128xf32>
    %c8_i32_79 = arith.constant 8 : i32
    %c0_80 = arith.constant 0 : index
    %c0_81 = arith.constant 0 : index
    %304 = vector.load %arg6[%c0_80, %c0_81] : memref<128x128xf32, #tpu.memory_space<vmem>>, vector<128x128xf32>
    %cst_82 = arith.constant dense<0.000000e+00> : vector<8x128xf32>
    %305 = tpu.matmul %303, %304, %cst_82 {dimension_numbers = #tpu.dot_dimension_numbers<[1], [0], [0], [1], [0, 0, 1, 1], [], []>} : vector<8x128xf32>, vector<128x128xf32>, vector<8x128xf32> -> vector<8x128xf32>
    %c0_83 = arith.constant 0 : index
    %c0_84 = arith.constant 0 : index
    %306 = vector.load %arg7[%c0_83, %c0_84] : memref<1x128xf32, #tpu.memory_space<vmem>>, vector<1x128xf32>
    %307 = vector.broadcast %306 : vector<1x128xf32> to vector<8x128xf32>
    %308 = arith.addf %305, %307 : vector<8x128xf32>
    %309 = math.tanh %308 : vector<8x128xf32>
    %c0_85 = arith.constant 0 : index
    %c0_86 = arith.constant 0 : index
    %310 = vector.load %arg8[%c0_85, %c0_86] : memref<128x128xf32, #tpu.memory_space<vmem>>, vector<128x128xf32>
    %cst_87 = arith.constant dense<0.000000e+00> : vector<8x128xf32>
    %311 = tpu.matmul %309, %310, %cst_87 {dimension_numbers = #tpu.dot_dimension_numbers<[1], [0], [0], [1], [0, 0, 1, 1], [], []>} : vector<8x128xf32>, vector<128x128xf32>, vector<8x128xf32> -> vector<8x128xf32>
    %c0_88 = arith.constant 0 : index
    %c0_89 = arith.constant 0 : index
    %312 = vector.load %arg9[%c0_88, %c0_89] : memref<1x128xf32, #tpu.memory_space<vmem>>, vector<1x128xf32>
    %313 = vector.broadcast %312 : vector<1x128xf32> to vector<8x128xf32>
    %314 = arith.addf %311, %313 : vector<8x128xf32>
    %315 = math.tanh %314 : vector<8x128xf32>
    %c0_90 = arith.constant 0 : index
    %c0_91 = arith.constant 0 : index
    %316 = vector.load %arg10[%c0_90, %c0_91] : memref<128x128xf32, #tpu.memory_space<vmem>>, vector<128x128xf32>
    %cst_92 = arith.constant dense<0.000000e+00> : vector<8x128xf32>
    %317 = tpu.matmul %315, %316, %cst_92 {dimension_numbers = #tpu.dot_dimension_numbers<[1], [0], [0], [1], [0, 0, 1, 1], [], []>} : vector<8x128xf32>, vector<128x128xf32>, vector<8x128xf32> -> vector<8x128xf32>
    %c0_93 = arith.constant 0 : index
    %c0_94 = arith.constant 0 : index
    %318 = vector.load %arg11[%c0_93, %c0_94] : memref<1x128xf32, #tpu.memory_space<vmem>>, vector<1x128xf32>
    %319 = vector.broadcast %318 : vector<1x128xf32> to vector<8x128xf32>
    %320 = arith.addf %317, %319 : vector<8x128xf32>
    %321 = arith.negf %320 : vector<8x128xf32>
    %322 = math.exp %321 : vector<8x128xf32>
    %cst_95 = arith.constant 1.000000e+00 : f32
    %323 = vector.broadcast %cst_95 : f32 to vector<8x128xf32>
    %324 = arith.addf %323, %322 : vector<8x128xf32>
    %325 = arith.divf %323, %324 : vector<8x128xf32>
    %c0_96 = arith.constant 0 : index
    %c0_97 = arith.constant 0 : index
    %326 = vector.load %arg12[%c0_96, %c0_97] : memref<8x128xf32, #tpu.memory_space<vmem>>, vector<8x128xf32>
    tpu.vector_store %arg12[%c0_96, %c0_97], %325 {strides = array<i32>} : memref<8x128xf32, #tpu.memory_space<vmem>>, vector<8x128xf32>,
    return
  }
  func.func @transform_0(%arg0: i32) -> (i32, i32) {
    %c0_i32 = arith.constant 0 : i32
    %c0_i32_0 = arith.constant 0 : i32
    %c0_i32_1 = arith.constant 0 : i32
    return %c0_i32, %c0_i32_0 : i32, i32
  }
  func.func @transform_1(%arg0: i32) -> (i32, i32) {
    %c0_i32 = arith.constant 0 : i32
    %c0_i32_0 = arith.constant 0 : i32
    %c0_i32_1 = arith.constant 0 : i32
    return %c0_i32, %c0_i32_0 : i32, i32
  }
  func.func @transform_2(%arg0: i32) -> (i32, i32) {
    %c0_i32 = arith.constant 0 : i32
    %c0_i32_0 = arith.constant 0 : i32
    %c0_i32_1 = arith.constant 0 : i32
    return %c0_i32, %c0_i32_0 : i32, i32
  }
  func.func @transform_3(%arg0: i32) -> (i32, i32) {
    %c0_i32 = arith.constant 0 : i32
    %c0_i32_0 = arith.constant 0 : i32
    %c0_i32_1 = arith.constant 0 : i32
    return %c0_i32, %c0_i32_0 : i32, i32
  }
  func.func @transform_4(%arg0: i32) -> (i32, i32) {
    %c0_i32 = arith.constant 0 : i32
    %c0_i32_0 = arith.constant 0 : i32
    %c0_i32_1 = arith.constant 0 : i32
    return %c0_i32, %c0_i32_0 : i32, i32
  }
  func.func @transform_5(%arg0: i32) -> (i32, i32) {
    %c0_i32 = arith.constant 0 : i32
    %c0_i32_0 = arith.constant 0 : i32
    %c0_i32_1 = arith.constant 0 : i32
    return %c0_i32, %c0_i32_0 : i32, i32
  }
  func.func @transform_6(%arg0: i32) -> (i32, i32) {
    %c0_i32 = arith.constant 0 : i32
    %c0_i32_0 = arith.constant 0 : i32
    %c0_i32_1 = arith.constant 0 : i32
    return %c0_i32, %c0_i32_0 : i32, i32
  }
  func.func @transform_7(%arg0: i32) -> (i32, i32) {
    %c0_i32 = arith.constant 0 : i32
    %c0_i32_0 = arith.constant 0 : i32
    %c0_i32_1 = arith.constant 0 : i32
    return %c0_i32, %c0_i32_0 : i32, i32
  }
  func.func @transform_8(%arg0: i32) -> (i32, i32) {
    %c0_i32 = arith.constant 0 : i32
    %c0_i32_0 = arith.constant 0 : i32
    %c0_i32_1 = arith.constant 0 : i32
    return %c0_i32, %c0_i32_0 : i32, i32
  }
  func.func @transform_9(%arg0: i32) -> (i32, i32) {
    %c0_i32 = arith.constant 0 : i32
    %c0_i32_0 = arith.constant 0 : i32
    %c0_i32_1 = arith.constant 0 : i32
    return %c0_i32, %c0_i32_0 : i32, i32
  }
  func.func @transform_10(%arg0: i32) -> (i32, i32) {
    %c0_i32 = arith.constant 0 : i32
    %c0_i32_0 = arith.constant 0 : i32
    %c0_i32_1 = arith.constant 0 : i32
    return %c0_i32, %c0_i32_0 : i32, i32
  }
  func.func @transform_11(%arg0: i32) -> (i32, i32) {
    %c0_i32 = arith.constant 0 : i32
    %c0_i32_0 = arith.constant 0 : i32
    %c0_i32_1 = arith.constant 0 : i32
    return %c0_i32, %c0_i32_0 : i32, i32
  }
}

</mosaic_0001>

<llo_original>
// kernel: rnnet_forward.1
$region0: #{rnnet_forward.1}
  #allocation0 [shape = 'u32[]', space=smem, size = 0x4, offset = 0x4, fixed_abs, tag = 'smem constant byte address 0x4 - core index']
  #allocation1 [shape = 'u32[144,128]{1,0:T(1,128)}', space=vmem, size = 0x12000, scoped, tag = 'internal scratch']
  #allocation2 [shape = 'f32[64,512]{1,0:T(8,128)}', space=vmem, size = 0x20000, scoped, tag = 'scratch operand']
  %s0 = inlined_call_operand.vmem [shape: f32[64,32], index: 0, kind: input, shape index: {}]
  %s1 = inlined_call_operand.vmem [shape: f32[64,1], index: 1, kind: input, shape index: {}]
  %s2 = inlined_call_operand.vmem [shape: f32[32,512], index: 2, kind: input, shape index: {}]
  %s3 = inlined_call_operand.hbm [shape: f32[128,512], index: 3, kind: input, shape index: {}]
  %s4 = inlined_call_operand.vmem [shape: f32[1,512], index: 4, kind: input, shape index: {}]
  %s5 = inlined_call_operand.vmem [shape: f32[128,128], index: 5, kind: input, shape index: {}]
  %s6 = inlined_call_operand.vmem [shape: f32[1,128], index: 6, kind: input, shape index: {}]
  %s7 = inlined_call_operand.hbm [shape: f32[128,128], index: 7, kind: input, shape index: {}]
  %s8 = inlined_call_operand.vmem [shape: f32[1,128], index: 8, kind: input, shape index: {}]
  %s9 = inlined_call_operand.hbm [shape: f32[128,128], index: 9, kind: input, shape index: {}]
  %s10 = inlined_call_operand.vmem [shape: f32[1,128], index: 10, kind: input, shape index: {}]
  %s11 = inlined_call_operand.vmem [shape: f32[8,128], index: 11, kind: output, shape index: {}]
  %s12 = sld [smem:[#allocation0]]
  $region66: #{rnnet_forward.1} parent=0
    _
  %s14 = ssub.s32 1, %s12
  %s15 = scalar_select 0, %s14, %s12
  $region1: #{rnnet_forward.1} parent=0
    #allocation3 [shape = 'u8[262144]{0}', space=vmem, size = 0x40000, scoped, tag = 'input window, operand 3, single buffered']
    #allocation4 [shape = 's32[1]{0}', space=sflag, size = 0x4, scoped, tag = 'scoped memory for rnnet_forward.1']
    #allocation5 [shape = 'u8[65536]{0}', space=vmem, size = 0x10000, scoped, tag = 'input window, operand 7, single buffered']
    #allocation6 [shape = 's32[1]{0}', space=sflag, size = 0x4, scoped, tag = 'scoped memory for rnnet_forward.1']
    #allocation7 [shape = 'u8[65536]{0}', space=vmem, size = 0x10000, scoped, tag = 'input window, operand 9, single buffered']
    %16 = vsyncpa [#allocation4], 0
    %17 = vsyncpa [#allocation6], 0
    // Predicated region
    $region2: #{rnnet_forward.1} parent=1 // pred_check
      _
    $region3: #{rnnet_forward.1} parent=1 // pred_check_branch
      %19 = sbr.rel (0) target = $region5
    $region4: #{rnnet_forward.1} parent=1 // pred_region
      _
    $region5: #{rnnet_forward.1} parent=1 // pred_fallthru
      _
    // Predicated region
    $region6: #{rnnet_forward.1} parent=1 // pred_check
      _
    $region7: #{rnnet_forward.1} parent=1 // pred_check_branch
      %21 = sbr.rel (0) target = $region9
    $region8: #{rnnet_forward.1} parent=1 // pred_region
      _
    $region9: #{rnnet_forward.1} parent=1 // pred_fallthru
      _
    // Predicated region
    $region10: #{rnnet_forward.1} parent=1 // pred_check
      _
    $region11: #{rnnet_forward.1} parent=1 // pred_check_branch
      %23 = sbr.rel (0) target = $region13
    $region12: #{rnnet_forward.1} parent=1 // pred_region
      _
    $region13: #{rnnet_forward.1} parent=1 // pred_fallthru
      _
    // Predicated region
    $region14: #{rnnet_forward.1} parent=1 // pred_check
      _
    $region15: #{rnnet_forward.1} parent=1 // pred_check_branch
      %25 = sbr.rel (0) target = $region17
    $region16: #{rnnet_forward.1} parent=1 // pred_region
      %s27 = ssub.s32 8192, 8192
      %28 = vsyncadd [#allocation4], %s27
      %s29 = sshll.u32 [#allocation3], 4
      %s30 = int_to_ptr.vmem [resolvable:$true] %s29
      %35 = dma.hbm_to_vmem [thread:$0]  %s3, 8192, %s30, [#allocation4], 512, 512, 32
    $region17: #{rnnet_forward.1} parent=1 // pred_fallthru
      _
    // Predicated region
    $region18: #{rnnet_forward.1} parent=1 // pred_check
      _
    $region19: #{rnnet_forward.1} parent=1 // pred_check_branch
      %37 = sbr.rel (0) target = $region21
    $region20: #{rnnet_forward.1} parent=1 // pred_region
      _
    $region21: #{rnnet_forward.1} parent=1 // pred_fallthru
      _
    // Predicated region
    $region22: #{rnnet_forward.1} parent=1 // pred_check
      _
    $region23: #{rnnet_forward.1} parent=1 // pred_check_branch
      %39 = sbr.rel (0) target = $region25
    $region24: #{rnnet_forward.1} parent=1 // pred_region
      _
    $region25: #{rnnet_forward.1} parent=1 // pred_fallthru
      _
    // Predicated region
    $region26: #{rnnet_forward.1} parent=1 // pred_check
      _
    $region27: #{rnnet_forward.1} parent=1 // pred_check_branch
      %41 = sbr.rel (0) target = $region29
    $region28: #{rnnet_forward.1} parent=1 // pred_region
      _
    $region29: #{rnnet_forward.1} parent=1 // pred_fallthru
      _
    // Predicated region
    $region30: #{rnnet_forward.1} parent=1 // pred_check
      _
    $region31: #{rnnet_forward.1} parent=1 // pred_check_branch
      %43 = sbr.rel (0) target = $region33
    $region32: #{rnnet_forward.1} parent=1 // pred_region
      %s45 = ssub.s32 2048, 2048
      %46 = vsyncadd [#allocation6], %s45
      %s47 = sshll.u32 [#allocation5], 4
      %s48 = int_to_ptr.vmem [resolvable:$true] %s47
      %53 = dma.hbm_to_vmem [thread:$0]  %s7, 2048, %s48, [#allocation6], 128, 128, 8
    $region33: #{rnnet_forward.1} parent=1 // pred_fallthru
      _
    // Predicated region
    $region34: #{rnnet_forward.1} parent=1 // pred_check
      _
    $region35: #{rnnet_forward.1} parent=1 // pred_check_branch
      %55 = sbr.rel (0) target = $region37
    $region36: #{rnnet_forward.1} parent=1 // pred_region
      _
    $region37: #{rnnet_forward.1} parent=1 // pred_fallthru
      _
    // Predicated region
    $region38: #{rnnet_forward.1} parent=1 // pred_check
      _
    $region39: #{rnnet_forward.1} parent=1 // pred_check_branch
      %57 = sbr.rel (0) target = $region41
    $region40: #{rnnet_forward.1} parent=1 // pred_region
      %s59 = ssub.s32 2048, 2048
      %60 = vsyncadd [#allocation6], %s59
      %s61 = sshll.u32 [#allocation7], 4
      %s62 = int_to_ptr.vmem [resolvable:$true] %s61
      %67 = dma.hbm_to_vmem [thread:$0]  %s9, 2048, %s62, [#allocation6], 128, 128, 8
    $region41: #{rnnet_forward.1} parent=1 // pred_fallthru
      _
    // Predicated region
    $region42: #{rnnet_forward.1} parent=1 // pred_check
      _
    $region43: #{rnnet_forward.1} parent=1 // pred_check_branch
      %69 = sbr.rel (0) target = $region45
    $region44: #{rnnet_forward.1} parent=1 // pred_region
      _
    $region45: #{rnnet_forward.1} parent=1 // pred_fallthru
      _
    // Predicated region
    $region46: #{rnnet_forward.1} parent=1 // pred_check
      _
    $region47: #{rnnet_forward.1} parent=1 // pred_check_branch
      %71 = sbr.rel (0) target = $region49
    $region48: #{rnnet_forward.1} parent=1 // pred_region
      %72 = dma.done [#allocation4], 8192
    $region49: #{rnnet_forward.1} parent=1 // pred_fallthru
      _
    // Predicated region
    $region50: #{rnnet_forward.1} parent=1 // pred_check
      _
    $region51: #{rnnet_forward.1} parent=1 // pred_check_branch
      %74 = sbr.rel (0) target = $region53
    $region52: #{rnnet_forward.1} parent=1 // pred_region
      %75 = dma.done [#allocation6], 2048
    $region53: #{rnnet_forward.1} parent=1 // pred_fallthru
      _
    // Predicated region
    $region54: #{rnnet_forward.1} parent=1 // pred_check
      _
    $region55: #{rnnet_forward.1} parent=1 // pred_check_branch
      %77 = sbr.rel (0) target = $region57
    $region56: #{rnnet_forward.1} parent=1 // pred_region
      %78 = dma.done [#allocation6], 2048
    $region57: #{rnnet_forward.1} parent=1 // pred_fallthru
      _
    %v79 = vld [vmem:[%s0] sm:$0xff]
    %v80 = vld [vmem:[%s0 + $0x8] sm:$0xff]
    %v81 = vld [vmem:[%s0 + $0x10] sm:$0xff]
    %v82 = vld [vmem:[%s0 + $0x18] sm:$0xff]
    %v83 = vld [vmem:[%s0 + $0x20] sm:$0xff]
    %v84 = vld [vmem:[%s0 + $0x28] sm:$0xff]
    %v85 = vld [vmem:[%s0 + $0x30] sm:$0xff]
    %v86 = vld [vmem:[%s0 + $0x38] sm:$0xff]
    %v87 = vld [vmem:[%s2] sm:$0xff]
    %v88 = vld [vmem:[%s2 + $0x8] sm:$0xff]
    %v89 = vld [vmem:[%s2 + $0x10] sm:$0xff]
    %v90 = vld [vmem:[%s2 + $0x18] sm:$0xff]
    %v91 = vld [vmem:[%s2 + $0x20] sm:$0xff]
    %v92 = vld [vmem:[%s2 + $0x28] sm:$0xff]
    %v93 = vld [vmem:[%s2 + $0x30] sm:$0xff]
    %v94 = vld [vmem:[%s2 + $0x38] sm:$0xff]
    %v95 = vld [vmem:[%s2 + $0x40] sm:$0xff]
    %v96 = vld [vmem:[%s2 + $0x48] sm:$0xff]
    %v97 = vld [vmem:[%s2 + $0x50] sm:$0xff]
    %v98 = vld [vmem:[%s2 + $0x58] sm:$0xff]
    %v99 = vld [vmem:[%s2 + $0x60] sm:$0xff]
    %v100 = vld [vmem:[%s2 + $0x68] sm:$0xff]
    %v101 = vld [vmem:[%s2 + $0x70] sm:$0xff]
    %v102 = vld [vmem:[%s2 + $0x78] sm:$0xff]
    %v103 = vld [vmem:[%s4] sm:$0xf]
    %v105 = vlaneseq
    %v106 = vshrl.u32 %v105, 7
    %v107 = vsub.s32 0, %v106
    %v108 = vrot.slane %v103, %v107
    %v109 = vlaneseq
    %v110 = vshrl.u32 %v109, 7
    %v111 = vsub.s32 1, %v110
    %v112 = vrot.slane %v103, %v111
    %v113 = vlaneseq
    %v114 = vshrl.u32 %v113, 7
    %v115 = vsub.s32 2, %v114
    %v116 = vrot.slane %v103, %v115
    %v117 = vlaneseq
    %v118 = vshrl.u32 %v117, 7
    %v119 = vsub.s32 3, %v118
    %v120 = vrot.slane %v103, %v119
    %vm125 = vcmask 261120
    %v127 = vsel %vm125, %v79, 0
    %v130 = vsel %vm125, %v80, 0
    %v133 = vsel %vm125, %v81, 0
    %v136 = vsel %vm125, %v82, 0
    %v139 = vsel %vm125, %v83, 0
    %v142 = vsel %vm125, %v84, 0
    %v145 = vsel %vm125, %v85, 0
    %v148 = vsel %vm125, %v86, 0
    %150 = vmatprep.subr.mxu0 %v88
    %151 = vmatpush1.msra.mxu0 %v87
    %152 = vmatprep.subr.mxu0 %v92
    %153 = vmatpush1.msra.mxu0 %v91
    %154 = vmatprep.subr.mxu0 %v96
    %155 = vmatpush1.msra.mxu0 %v95
    %156 = vmatprep.subr.mxu0 %v100
    %157 = vmatpush1.msra.mxu0 %v99
    %158 = vmatprep.subr.mxu0 0.0
    %159 = vmatpush1.msra.mxu0 0.0
    %160 = vmatprep.subr.mxu0 0.0
    %161 = vmatpush1.msra.mxu0 0.0
    %162 = vmatprep.subr.mxu0 0.0
    %163 = vmatpush1.msra.mxu0 0.0
    %164 = vmatprep.subr.mxu0 0.0
    %165 = vmatpush1.msra.mxu0 0.0
    %166 = vmatprep.subr.mxu0 0.0
    %167 = vmatpush1.msra.mxu0 0.0
    %168 = vmatprep.subr.mxu0 0.0
    %169 = vmatpush1.msra.mxu0 0.0
    %170 = vmatprep.subr.mxu0 0.0
    %171 = vmatpush1.msra.mxu0 0.0
    %172 = vmatprep.subr.mxu0 0.0
    %173 = vmatpush1.msra.mxu0 0.0
    %174 = vmatprep.subr.mxu0 0.0
    %175 = vmatpush1.msra.mxu0 0.0
    %176 = vmatprep.subr.mxu0 0.0
    %177 = vmatpush1.msra.mxu0 0.0
    %178 = vmatprep.subr.mxu0 0.0
    %179 = vmatpush1.msra.mxu0 0.0
    %180 = vmatprep.subr.mxu0 0.0
    %181 = vmatpush1.msra.mxu0 0.0
    %182 = vmatprep.subr.mxu0 0.0
    %183 = vmatpush1.msra.mxu0 0.0
    %184 = vmatprep.subr.mxu0 0.0
    %185 = vmatpush1.msra.mxu0 0.0
    %186 = vmatprep.subr.mxu0 0.0
    %187 = vmatpush1.msra.mxu0 0.0
    %188 = vmatprep.subr.mxu0 0.0
    %189 = vmatpush1.msra.mxu0 0.0
    %190 = vmatprep.subr.mxu0 0.0
    %191 = vmatpush1.msra.mxu0 0.0
    %192 = vmatprep.subr.mxu0 0.0
    %193 = vmatpush1.msra.mxu0 0.0
    %194 = vmatprep.subr.mxu0 0.0
    %195 = vmatpush1.msra.mxu0 0.0
    %196 = vmatprep.subr.mxu0 0.0
    %197 = vmatpush1.msra.mxu0 0.0
    %198 = vmatprep.subr.mxu0 0.0
    %199 = vmatpush1.msra.mxu0 0.0
    %200 = vmatprep.subr.mxu0 0.0
    %201 = vmatpush1.msra.mxu0 0.0
    %202 = vmatprep.subr.mxu0 0.0
    %203 = vmatpush1.msra.mxu0 0.0
    %204 = vmatprep.subr.mxu0 0.0
    %205 = vmatpush1.msra.mxu0 0.0
    %206 = vmatprep.subr.mxu0 0.0
    %207 = vmatpush1.msra.mxu0 0.0
    %208 = vmatprep.subr.mxu0 0.0
    %209 = vmatpush1.msra.mxu0 0.0
    %210 = vmatprep.subr.mxu0 0.0
    %211 = vmatpush1.msra.mxu0 0.0
    %212 = vmatprep.subr.mxu0 0.0
    %213 = vmatpush1.msra.mxu0 0.0
    %214 = vmatprep.mubr.f32.mxu0 0.0
    %215 = vmatmul.mubr.f32.gmra.mrb[0].mxu0 %v127
    %v216 = vpop.f32.mrb[0].mxu0
    %v217 = vadd.f32 %v108, %v216
    %v218 = vpop.f32.mrb[0].mxu0
    %v219 = vadd.f32 %v112, %v218
    %220 = vmatprep.mubr.f32.mxu0 0.0
    %221 = vmatmul.mubr.f32.gmra.mrb[0].mxu0 %v130
    %v222 = vpop.f32.mrb[0].mxu0
    %v223 = vadd.f32 %v108, %v222
    %v224 = vpop.f32.mrb[0].mxu0
    %v225 = vadd.f32 %v112, %v224
    %226 = vmatprep.mubr.f32.mxu0 0.0
    %227 = vmatmul.mubr.f32.gmra.mrb[0].mxu0 %v133
    %v228 = vpop.f32.mrb[0].mxu0
    %v229 = vadd.f32 %v108, %v228
    %v230 = vpop.f32.mrb[0].mxu0
    %v231 = vadd.f32 %v112, %v230
    %232 = vmatprep.mubr.f32.mxu0 0.0
    %233 = vmatmul.mubr.f32.gmra.mrb[0].mxu0 %v136
    %v234 = vpop.f32.mrb[0].mxu0
    %v235 = vadd.f32 %v108, %v234
    %v236 = vpop.f32.mrb[0].mxu0
    %v237 = vadd.f32 %v112, %v236
    %238 = vmatprep.mubr.f32.mxu0 0.0
    %239 = vmatmul.mubr.f32.gmra.mrb[0].mxu0 %v139
    %v240 = vpop.f32.mrb[0].mxu0
    %v241 = vadd.f32 %v108, %v240
    %v242 = vpop.f32.mrb[0].mxu0
    %v243 = vadd.f32 %v112, %v242
    %244 = vmatprep.mubr.f32.mxu0 0.0
    %245 = vmatmul.mubr.f32.gmra.mrb[0].mxu0 %v142
    %v246 = vpop.f32.mrb[0].mxu0
    %v247 = vadd.f32 %v108, %v246
    %v248 = vpop.f32.mrb[0].mxu0
    %v249 = vadd.f32 %v112, %v248
    %250 = vmatprep.mubr.f32.mxu0 0.0
    %251 = vmatmul.mubr.f32.gmra.mrb[0].mxu0 %v145
    %v252 = vpop.f32.mrb[0].mxu0
    %v253 = vadd.f32 %v108, %v252
    %v254 = vpop.f32.mrb[0].mxu0
    %v255 = vadd.f32 %v112, %v254
    %256 = vmatprep.mubr.f32.mxu0 0.0
    %257 = vmatmul.mubr.f32.gmra.mrb[0].mxu0 %v148
    %v258 = vpop.f32.mrb[0].mxu0
    %v259 = vadd.f32 %v108, %v258
    %v260 = vpop.f32.mrb[0].mxu0
    %v261 = vadd.f32 %v112, %v260
    %262 = vdwg.mxu0
    %263 = vmatprep.subr.mxu0 %v90
    %264 = vmatpush1.msra.mxu0 %v89
    %265 = vmatprep.subr.mxu0 %v94
    %266 = vmatpush1.msra.mxu0 %v93
    %267 = vmatprep.subr.mxu0 %v98
    %268 = vmatpush1.msra.mxu0 %v97
    %269 = vmatprep.subr.mxu0 %v102
    %270 = vmatpush1.msra.mxu0 %v101
    %271 = vmatprep.subr.mxu0 0.0
    %272 = vmatpush1.msra.mxu0 0.0
    %273 = vmatprep.subr.mxu0 0.0
    %274 = vmatpush1.msra.mxu0 0.0
    %275 = vmatprep.subr.mxu0 0.0
    %276 = vmatpush1.msra.mxu0 0.0
    %277 = vmatprep.subr.mxu0 0.0
    %278 = vmatpush1.msra.mxu0 0.0
    %279 = vmatprep.subr.mxu0 0.0
    %280 = vmatpush1.msra.mxu0 0.0
    %281 = vmatprep.subr.mxu0 0.0
    %282 = vmatpush1.msra.mxu0 0.0
    %283 = vmatprep.subr.mxu0 0.0
    %284 = vmatpush1.msra.mxu0 0.0
    %285 = vmatprep.subr.mxu0 0.0
    %286 = vmatpush1.msra.mxu0 0.0
    %287 = vmatprep.subr.mxu0 0.0
    %288 = vmatpush1.msra.mxu0 0.0
    %289 = vmatprep.subr.mxu0 0.0
    %290 = vmatpush1.msra.mxu0 0.0
    %291 = vmatprep.subr.mxu0 0.0
    %292 = vmatpush1.msra.mxu0 0.0
    %293 = vmatprep.subr.mxu0 0.0
    %294 = vmatpush1.msra.mxu0 0.0
    %295 = vmatprep.subr.mxu0 0.0
    %296 = vmatpush1.msra.mxu0 0.0
    %297 = vmatprep.subr.mxu0 0.0
    %298 = vmatpush1.msra.mxu0 0.0
    %299 = vmatprep.subr.mxu0 0.0
    %300 = vmatpush1.msra.mxu0 0.0
    %301 = vmatprep.subr.mxu0 0.0
    %302 = vmatpush1.msra.mxu0 0.0
    %303 = vmatprep.subr.mxu0 0.0
    %304 = vmatpush1.msra.mxu0 0.0
    %305 = vmatprep.subr.mxu0 0.0
    %306 = vmatpush1.msra.mxu0 0.0
    %307 = vmatprep.subr.mxu0 0.0
    %308 = vmatpush1.msra.mxu0 0.0
    %309 = vmatprep.subr.mxu0 0.0
    %310 = vmatpush1.msra.mxu0 0.0
    %311 = vmatprep.subr.mxu0 0.0
    %312 = vmatpush1.msra.mxu0 0.0
    %313 = vmatprep.subr.mxu0 0.0
    %314 = vmatpush1.msra.mxu0 0.0
    %315 = vmatprep.subr.mxu0 0.0
    %316 = vmatpush1.msra.mxu0 0.0
    %317 = vmatprep.subr.mxu0 0.0
    %318 = vmatpush1.msra.mxu0 0.0
    %319 = vmatprep.subr.mxu0 0.0
    %320 = vmatpush1.msra.mxu0 0.0
    %321 = vmatprep.subr.mxu0 0.0
    %322 = vmatpush1.msra.mxu0 0.0
    %323 = vmatprep.subr.mxu0 0.0
    %324 = vmatpush1.msra.mxu0 0.0
    %325 = vmatprep.subr.mxu0 0.0
    %326 = vmatpush1.msra.mxu0 0.0
    %327 = vmatprep.mubr.f32.mxu0 0.0
    %328 = vmatmul.mubr.f32.gmra.mrb[0].mxu0 %v127
    %v329 = vpop.f32.mrb[0].mxu0
    %v330 = vadd.f32 %v116, %v329
    %v331 = vpop.f32.mrb[0].mxu0
    %v332 = vadd.f32 %v120, %v331
    %333 = vmatprep.mubr.f32.mxu0 0.0
    %334 = vmatmul.mubr.f32.gmra.mrb[0].mxu0 %v130
    %v335 = vpop.f32.mrb[0].mxu0
    %v336 = vadd.f32 %v116, %v335
    %v337 = vpop.f32.mrb[0].mxu0
    %v338 = vadd.f32 %v120, %v337
    %339 = vmatprep.mubr.f32.mxu0 0.0
    %340 = vmatmul.mubr.f32.gmra.mrb[0].mxu0 %v133
    %v341 = vpop.f32.mrb[0].mxu0
    %v342 = vadd.f32 %v116, %v341
    %v343 = vpop.f32.mrb[0].mxu0
    %v344 = vadd.f32 %v120, %v343
    %345 = vmatprep.mubr.f32.mxu0 0.0
    %346 = vmatmul.mubr.f32.gmra.mrb[0].mxu0 %v136
    %v347 = vpop.f32.mrb[0].mxu0
    %v348 = vadd.f32 %v116, %v347
    %v349 = vpop.f32.mrb[0].mxu0
    %v350 = vadd.f32 %v120, %v349
    %351 = vmatprep.mubr.f32.mxu0 0.0
    %352 = vmatmul.mubr.f32.gmra.mrb[0].mxu0 %v139
    %v353 = vpop.f32.mrb[0].mxu0
    %v354 = vadd.f32 %v116, %v353
    %v355 = vpop.f32.mrb[0].mxu0
    %v356 = vadd.f32 %v120, %v355
    %357 = vmatprep.mubr.f32.mxu0 0.0
    %358 = vmatmul.mubr.f32.gmra.mrb[0].mxu0 %v142
    %v359 = vpop.f32.mrb[0].mxu0
    %v360 = vadd.f32 %v116, %v359
    %v361 = vpop.f32.mrb[0].mxu0
    %v362 = vadd.f32 %v120, %v361
    %363 = vmatprep.mubr.f32.mxu0 0.0
    %364 = vmatmul.mubr.f32.gmra.mrb[0].mxu0 %v145
    %v365 = vpop.f32.mrb[0].mxu0
    %v366 = vadd.f32 %v116, %v365
    %v367 = vpop.f32.mrb[0].mxu0
    %v368 = vadd.f32 %v120, %v367
    %369 = vmatprep.mubr.f32.mxu0 0.0
    %370 = vmatmul.mubr.f32.gmra.mrb[0].mxu0 %v148
    %v371 = vpop.f32.mrb[0].mxu0
    %v372 = vadd.f32 %v116, %v371
    %v373 = vpop.f32.mrb[0].mxu0
    %v374 = vadd.f32 %v120, %v373
    %375 = vdwg.mxu0
    %376 = vst [vmem:[#allocation2] sm:$0xff] %v217
    %377 = vst [vmem:[#allocation2 + $0x8] sm:$0xff] %v219
    %378 = vst [vmem:[#allocation2 + $0x10] sm:$0xff] %v330
    %379 = vst [vmem:[#allocation2 + $0x18] sm:$0xff] %v332
    %380 = vst [vmem:[#allocation2 + $0x20] sm:$0xff] %v223
    %381 = vst [vmem:[#allocation2 + $0x28] sm:$0xff] %v225
    %382 = vst [vmem:[#allocation2 + $0x30] sm:$0xff] %v336
    %383 = vst [vmem:[#allocation2 + $0x38] sm:$0xff] %v338
    %384 = vst [vmem:[#allocation2 + $0x40] sm:$0xff] %v229
    %385 = vst [vmem:[#allocation2 + $0x48] sm:$0xff] %v231
    %386 = vst [vmem:[#allocation2 + $0x50] sm:$0xff] %v342
    %387 = vst [vmem:[#allocation2 + $0x58] sm:$0xff] %v344
    %388 = vst [vmem:[#allocation2 + $0x60] sm:$0xff] %v235
    %389 = vst [vmem:[#allocation2 + $0x68] sm:$0xff] %v237
    %390 = vst [vmem:[#allocation2 + $0x70] sm:$0xff] %v348
    %391 = vst [vmem:[#allocation2 + $0x78] sm:$0xff] %v350
    %392 = vst [vmem:[#allocation2 + $0x80] sm:$0xff] %v241
    %393 = vst [vmem:[#allocation2 + $0x88] sm:$0xff] %v243
    %394 = vst [vmem:[#allocation2 + $0x90] sm:$0xff] %v354
    %395 = vst [vmem:[#allocation2 + $0x98] sm:$0xff] %v356
    %396 = vst [vmem:[#allocation2 + $0xa0] sm:$0xff] %v247
    %397 = vst [vmem:[#allocation2 + $0xa8] sm:$0xff] %v249
    %398 = vst [vmem:[#allocation2 + $0xb0] sm:$0xff] %v360
    %399 = vst [vmem:[#allocation2 + $0xb8] sm:$0xff] %v362
    %400 = vst [vmem:[#allocation2 + $0xc0] sm:$0xff] %v253
    %401 = vst [vmem:[#allocation2 + $0xc8] sm:$0xff] %v255
    %402 = vst [vmem:[#allocation2 + $0xd0] sm:$0xff] %v366
    %403 = vst [vmem:[#allocation2 + $0xd8] sm:$0xff] %v368
    %404 = vst [vmem:[#allocation2 + $0xe0] sm:$0xff] %v259
    %405 = vst [vmem:[#allocation2 + $0xe8] sm:$0xff] %v261
    %406 = vst [vmem:[#allocation2 + $0xf0] sm:$0xff] %v372
    %407 = vst [vmem:[#allocation2 + $0xf8] sm:$0xff] %v374
    %s408 = smul.u32 0, 4
    %s409 = smul.addr %s408, 8
    %s410 = scalar_lea.vmem [#allocation2], %s409
    %v411 = vld [vmem:[%s410] sm:$0xff]
    %v412 = vld [vmem:[%s410 + $0x8] sm:$0xff]
    %v413 = vld [vmem:[%s410 + $0x10] sm:$0xff]
    %v414 = vld [vmem:[%s410 + $0x18] sm:$0xff]
    %v415 = vld [vmem:[#allocation3] sm:$0xff]
    %v416 = vld [vmem:[#allocation3 + $0x8] sm:$0xff]
    %v417 = vld [vmem:[#allocation3 + $0x10] sm:$0xff]
    %v418 = vld [vmem:[#allocation3 + $0x18] sm:$0xff]
    %v419 = vld [vmem:[#allocation3 + $0x20] sm:$0xff]
    %v420 = vld [vmem:[#allocation3 + $0x28] sm:$0xff]
    %v421 = vld [vmem:[#allocation3 + $0x30] sm:$0xff]
    %v422 = vld [vmem:[#allocation3 + $0x38] sm:$0xff]
    %v423 = vld [vmem:[#allocation3 + $0x40] sm:$0xff]
    %v424 = vld [vmem:[#allocation3 + $0x48] sm:$0xff]
    %v425 = vld [vmem:[#allocation3 + $0x50] sm:$0xff]
    %v426 = vld [vmem:[#allocation3 + $0x58] sm:$0xff]
    %v427 = vld [vmem:[#allocation3 + $0x60] sm:$0xff]
    %v428 = vld [vmem:[#allocation3 + $0x68] sm:$0xff]
    %v429 = vld [vmem:[#allocation3 + $0x70] sm:$0xff]
    %v430 = vld [vmem:[#allocation3 + $0x78] sm:$0xff]
    %v431 = vld [vmem:[#allocation3 + $0x80] sm:$0xff]
    %v432 = vld [vmem:[#allocation3 + $0x88] sm:$0xff]
    %v433 = vld [vmem:[#allocation3 + $0x90] sm:$0xff]
    %v434 = vld [vmem:[#allocation3 + $0x98] sm:$0xff]
    %v435 = vld [vmem:[#allocation3 + $0xa0] sm:$0xff]
    %v436 = vld [vmem:[#allocation3 + $0xa8] sm:$0xff]
    %v437 = vld [vmem:[#allocation3 + $0xb0] sm:$0xff]
    %v438 = vld [vmem:[#allocation3 + $0xb8] sm:$0xff]
    %v439 = vld [vmem:[#allocation3 + $0xc0] sm:$0xff]
    %v440 = vld [vmem:[#allocation3 + $0xc8] sm:$0xff]
    %v441 = vld [vmem:[#allocation3 + $0xd0] sm:$0xff]
    %v442 = vld [vmem:[#allocation3 + $0xd8] sm:$0xff]
    %v443 = vld [vmem:[#allocation3 + $0xe0] sm:$0xff]
    %v444 = vld [vmem:[#allocation3 + $0xe8] sm:$0xff]
    %v445 = vld [vmem:[#allocation3 + $0xf0] sm:$0xff]
    %v446 = vld [vmem:[#allocation3 + $0xf8] sm:$0xff]
    %v447 = vld [vmem:[#allocation3 + $0x100] sm:$0xff]
    %v448 = vld [vmem:[#allocation3 + $0x108] sm:$0xff]
    %v449 = vld [vmem:[#allocation3 + $0x110] sm:$0xff]
    %v450 = vld [vmem:[#allocation3 + $0x118] sm:$0xff]
    %v451 = vld [vmem:[#allocation3 + $0x120] sm:$0xff]
    %v452 = vld [vmem:[#allocation3 + $0x128] sm:$0xff]
    %v453 = vld [vmem:[#allocation3 + $0x130] sm:$0xff]
    %v454 = vld [vmem:[#allocation3 + $0x138] sm:$0xff]
    %v455 = vld [vmem:[#allocation3 + $0x140] sm:$0xff]
    %v456 = vld [vmem:[#allocation3 + $0x148] sm:$0xff]
    %v457 = vld [vmem:[#allocation3 + $0x150] sm:$0xff]
    %v458 = vld [vmem:[#allocation3 + $0x158] sm:$0xff]
    %v459 = vld [vmem:[#allocation3 + $0x160] sm:$0xff]
    %v460 = vld [vmem:[#allocation3 + $0x168] sm:$0xff]
    %v461 = vld [vmem:[#allocation3 + $0x170] sm:$0xff]
    %v462 = vld [vmem:[#allocation3 + $0x178] sm:$0xff]
    %v463 = vld [vmem:[#allocation3 + $0x180] sm:$0xff]
    %v464 = vld [vmem:[#allocation3 + $0x188] sm:$0xff]
    %v465 = vld [vmem:[#allocation3 + $0x190] sm:$0xff]
    %v466 = vld [vmem:[#allocation3 + $0x198] sm:$0xff]
    %v467 = vld [vmem:[#allocation3 + $0x1a0] sm:$0xff]
    %v468 = vld [vmem:[#allocation3 + $0x1a8] sm:$0xff]
    %v469 = vld [vmem:[#allocation3 + $0x1b0] sm:$0xff]
    %v470 = vld [vmem:[#allocation3 + $0x1b8] sm:$0xff]
    %v471 = vld [vmem:[#allocation3 + $0x1c0] sm:$0xff]
    %v472 = vld [vmem:[#allocation3 + $0x1c8] sm:$0xff]
    %v473 = vld [vmem:[#allocation3 + $0x1d0] sm:$0xff]
    %v474 = vld [vmem:[#allocation3 + $0x1d8] sm:$0xff]
    %v475 = vld [vmem:[#allocation3 + $0x1e0] sm:$0xff]
    %v476 = vld [vmem:[#allocation3 + $0x1e8] sm:$0xff]
    %v477 = vld [vmem:[#allocation3 + $0x1f0] sm:$0xff]
    %v478 = vld [vmem:[#allocation3 + $0x1f8] sm:$0xff]
    %479 = vmatprep.subr.mxu0 %v416
    %480 = vmatpush1.msra.mxu0 %v415
    %481 = vmatprep.subr.mxu0 %v420
    %482 = vmatpush1.msra.mxu0 %v419
    %483 = vmatprep.subr.mxu0 %v424
    %484 = vmatpush1.msra.mxu0 %v423
    %485 = vmatprep.subr.mxu0 %v428
    %486 = vmatpush1.msra.mxu0 %v427
    %487 = vmatprep.subr.mxu0 %v432
    %488 = vmatpush1.msra.mxu0 %v431
    %489 = vmatprep.subr.mxu0 %v436
    %490 = vmatpush1.msra.mxu0 %v435
    %491 = vmatprep.subr.mxu0 %v440
    %492 = vmatpush1.msra.mxu0 %v439
    %493 = vmatprep.subr.mxu0 %v444
    %494 = vmatpush1.msra.mxu0 %v443
    %495 = vmatprep.subr.mxu0 %v448
    %496 = vmatpush1.msra.mxu0 %v447
    %497 = vmatprep.subr.mxu0 %v452
    %498 = vmatpush1.msra.mxu0 %v451
    %499 = vmatprep.subr.mxu0 %v456
    %500 = vmatpush1.msra.mxu0 %v455
    %501 = vmatprep.subr.mxu0 %v460
    %502 = vmatpush1.msra.mxu0 %v459
    %503 = vmatprep.subr.mxu0 %v464
    %504 = vmatpush1.msra.mxu0 %v463
    %505 = vmatprep.subr.mxu0 %v468
    %506 = vmatpush1.msra.mxu0 %v467
    %507 = vmatprep.subr.mxu0 %v472
    %508 = vmatpush1.msra.mxu0 %v471
    %509 = vmatprep.subr.mxu0 %v476
    %510 = vmatpush1.msra.mxu0 %v475
    %511 = vmatprep.subr.mxu0 0.0
    %512 = vmatpush1.msra.mxu0 0.0
    %513 = vmatprep.subr.mxu0 0.0
    %514 = vmatpush1.msra.mxu0 0.0
    %515 = vmatprep.subr.mxu0 0.0
    %516 = vmatpush1.msra.mxu0 0.0
    %517 = vmatprep.subr.mxu0 0.0
    %518 = vmatpush1.msra.mxu0 0.0
    %519 = vmatprep.subr.mxu0 0.0
    %520 = vmatpush1.msra.mxu0 0.0
    %521 = vmatprep.subr.mxu0 0.0
    %522 = vmatpush1.msra.mxu0 0.0
    %523 = vmatprep.subr.mxu0 0.0
    %524 = vmatpush1.msra.mxu0 0.0
    %525 = vmatprep.subr.mxu0 0.0
    %526 = vmatpush1.msra.mxu0 0.0
    %527 = vmatprep.subr.mxu0 0.0
    %528 = vmatpush1.msra.mxu0 0.0
    %529 = vmatprep.subr.mxu0 0.0
    %530 = vmatpush1.msra.mxu0 0.0
    %531 = vmatprep.subr.mxu0 0.0
    %532 = vmatpush1.msra.mxu0 0.0
    %533 = vmatprep.subr.mxu0 0.0
    %534 = vmatpush1.msra.mxu0 0.0
    %535 = vmatprep.subr.mxu0 0.0
    %536 = vmatpush1.msra.mxu0 0.0
    %537 = vmatprep.subr.mxu0 0.0
    %538 = vmatpush1.msra.mxu0 0.0
    %539 = vmatprep.subr.mxu0 0.0
    %540 = vmatpush1.msra.mxu0 0.0
    %541 = vmatprep.subr.mxu0 0.0
    %542 = vmatpush1.msra.mxu0 0.0
    %543 = vmatprep.mubr.f32.mxu0 0.0
    %544 = vmatmul.mubr.f32.gmra.mrb[0].mxu0 0.0
    %v545 = vpop.f32.mrb[0].mxu0
    %v546 = vadd.f32 0.0, %v545
    %v547 = vpop.f32.mrb[0].mxu0
    %v548 = vadd.f32 0.0, %v547
    %549 = vdwg.mxu0
    %550 = vmatprep.subr.mxu0 %v418
    %551 = vmatpush1.msra.mxu0 %v417
    %552 = vmatprep.subr.mxu0 %v422
    %553 = vmatpush1.msra.mxu0 %v421
    %554 = vmatprep.subr.mxu0 %v426
    %555 = vmatpush1.msra.mxu0 %v425
    %556 = vmatprep.subr.mxu0 %v430
    %557 = vmatpush1.msra.mxu0 %v429
    %558 = vmatprep.subr.mxu0 %v434
    %559 = vmatpush1.msra.mxu0 %v433
    %560 = vmatprep.subr.mxu0 %v438
    %561 = vmatpush1.msra.mxu0 %v437
    %562 = vmatprep.subr.mxu0 %v442
    %563 = vmatpush1.msra.mxu0 %v441
    %564 = vmatprep.subr.mxu0 %v446
    %565 = vmatpush1.msra.mxu0 %v445
    %566 = vmatprep.subr.mxu0 %v450
    %567 = vmatpush1.msra.mxu0 %v449
    %568 = vmatprep.subr.mxu0 %v454
    %569 = vmatpush1.msra.mxu0 %v453
    %570 = vmatprep.subr.mxu0 %v458
    %571 = vmatpush1.msra.mxu0 %v457
    %572 = vmatprep.subr.mxu0 %v462
    %573 = vmatpush1.msra.mxu0 %v461
    %574 = vmatprep.subr.mxu0 %v466
    %575 = vmatpush1.msra.mxu0 %v465
    %576 = vmatprep.subr.mxu0 %v470
    %577 = vmatpush1.msra.mxu0 %v469
    %578 = vmatprep.subr.mxu0 %v474
    %579 = vmatpush1.msra.mxu0 %v473
    %580 = vmatprep.subr.mxu0 %v478
    %581 = vmatpush1.msra.mxu0 %v477
    %582 = vmatprep.subr.mxu0 0.0
    %583 = vmatpush1.msra.mxu0 0.0
    %584 = vmatprep.subr.mxu0 0.0
    %585 = vmatpush1.msra.mxu0 0.0
    %586 = vmatprep.subr.mxu0 0.0
    %587 = vmatpush1.msra.mxu0 0.0
    %588 = vmatprep.subr.mxu0 0.0
    %589 = vmatpush1.msra.mxu0 0.0
    %590 = vmatprep.subr.mxu0 0.0
    %591 = vmatpush1.msra.mxu0 0.0
    %592 = vmatprep.subr.mxu0 0.0
    %593 = vmatpush1.msra.mxu0 0.0
    %594 = vmatprep.subr.mxu0 0.0
    %595 = vmatpush1.msra.mxu0 0.0
    %596 = vmatprep.subr.mxu0 0.0
    %597 = vmatpush1.msra.mxu0 0.0
    %598 = vmatprep.subr.mxu0 0.0
    %599 = vmatpush1.msra.mxu0 0.0
    %600 = vmatprep.subr.mxu0 0.0
    %601 = vmatpush1.msra.mxu0 0.0
    %602 = vmatprep.subr.mxu0 0.0
    %603 = vmatpush1.msra.mxu0 0.0
    %604 = vmatprep.subr.mxu0 0.0
    %605 = vmatpush1.msra.mxu0 0.0
    %606 = vmatprep.subr.mxu0 0.0
    %607 = vmatpush1.msra.mxu0 0.0
    %608 = vmatprep.subr.mxu0 0.0
    %609 = vmatpush1.msra.mxu0 0.0
    %610 = vmatprep.subr.mxu0 0.0
    %611 = vmatpush1.msra.mxu0 0.0
    %612 = vmatprep.subr.mxu0 0.0
    %613 = vmatpush1.msra.mxu0 0.0
    %614 = vmatprep.mubr.f32.mxu0 0.0
    %615 = vmatmul.mubr.f32.gmra.mrb[0].mxu0 0.0
    %v616 = vpop.f32.mrb[0].mxu0
    %v617 = vadd.f32 0.0, %v616
    %v618 = vpop.f32.mrb[0].mxu0
    %v619 = vadd.f32 0.0, %v618
    %620 = vdwg.mxu0
    %v621 = vadd.f32 %v411, %v546
    %v622 = vadd.f32 %v412, %v548
    %v623 = vadd.f32 %v413, %v617
    %v624 = vadd.f32 %v414, %v619
    %v625 = vxor.u32 %v621, 2147483648
    %v626 = vmul.f32 %v625, 1.442695
    %v627 = vpow.pop %v626
    %v628 = vadd.f32 %v627, 1.0
    %v629 = vrcp.pop %v628
    %v630 = vmul.f32 1.0, %v629
    %v631 = vxor.u32 %v622, 2147483648
    %v632 = vmul.f32 %v631, 1.442695
    %v633 = vpow.pop %v632
    %v634 = vadd.f32 %v633, 1.0
    %v635 = vrcp.pop %v634
    %v636 = vmul.f32 1.0, %v635
    %v637 = vtanh.pop %v623
    %v638 = vxor.u32 %v624, 2147483648
    %v639 = vmul.f32 %v638, 1.442695
    %v640 = vpow.pop %v639
    %v641 = vadd.f32 %v640, 1.0
    %v642 = vrcp.pop %v641
    %v643 = vmul.f32 1.0, %v642
    %v644 = vmul.f32 %v636, 0.0
    %v645 = vmul.f32 %v630, %v637
    %v646 = vadd.f32 %v644, %v645
    %v647 = vtanh.pop %v646
    %v648 = vmul.f32 %v643, %v647
    %v649 = vld [vmem:[%s1] sm:$0xff]
    %651 = vset.pattern.permute.xlu0 0
    %652 = vperm.xlu0 %651, %v649
    %v653 = vpop.permute.xlu0 %652
    %v655 = vmul.f32 %v653, %v648
    %v656 = vadd.f32 %v655, 0.0
    %s657 = smul.u32 1, 4
    %s658 = smul.addr %s657, 8
    %s659 = scalar_lea.vmem [#allocation2], %s658
    %v660 = vld [vmem:[%s659] sm:$0xff]
    %v661 = vld [vmem:[%s659 + $0x8] sm:$0xff]
    %v662 = vld [vmem:[%s659 + $0x10] sm:$0xff]
    %v663 = vld [vmem:[%s659 + $0x18] sm:$0xff]
    %664 = vmatprep.subr.mxu0 %v416
    %665 = vmatpush1.msra.mxu0 %v415
    %666 = vmatprep.subr.mxu0 %v420
    %667 = vmatpush1.msra.mxu0 %v419
    %668 = vmatprep.subr.mxu0 %v424
    %669 = vmatpush1.msra.mxu0 %v423
    %670 = vmatprep.subr.mxu0 %v428
    %671 = vmatpush1.msra.mxu0 %v427
    %672 = vmatprep.subr.mxu0 %v432
    %673 = vmatpush1.msra.mxu0 %v431
    %674 = vmatprep.subr.mxu0 %v436
    %675 = vmatpush1.msra.mxu0 %v435
    %676 = vmatprep.subr.mxu0 %v440
    %677 = vmatpush1.msra.mxu0 %v439
    %678 = vmatprep.subr.mxu0 %v444
    %679 = vmatpush1.msra.mxu0 %v443
    %680 = vmatprep.subr.mxu0 %v448
    %681 = vmatpush1.msra.mxu0 %v447
    %682 = vmatprep.subr.mxu0 %v452
    %683 = vmatpush1.msra.mxu0 %v451
    %684 = vmatprep.subr.mxu0 %v456
    %685 = vmatpush1.msra.mxu0 %v455
    %686 = vmatprep.subr.mxu0 %v460
    %687 = vmatpush1.msra.mxu0 %v459
    %688 = vmatprep.subr.mxu0 %v464
    %689 = vmatpush1.msra.mxu0 %v463
    %690 = vmatprep.subr.mxu0 %v468
    %691 = vmatpush1.msra.mxu0 %v467
    %692 = vmatprep.subr.mxu0 %v472
    %693 = vmatpush1.msra.mxu0 %v471
    %694 = vmatprep.subr.mxu0 %v476
    %695 = vmatpush1.msra.mxu0 %v475
    %696 = vmatprep.subr.mxu0 0.0
    %697 = vmatpush1.msra.mxu0 0.0
    %698 = vmatprep.subr.mxu0 0.0
    %699 = vmatpush1.msra.mxu0 0.0
    %700 = vmatprep.subr.mxu0 0.0
    %701 = vmatpush1.msra.mxu0 0.0
    %702 = vmatprep.subr.mxu0 0.0
    %703 = vmatpush1.msra.mxu0 0.0
    %704 = vmatprep.subr.mxu0 0.0
    %705 = vmatpush1.msra.mxu0 0.0
    %706 = vmatprep.subr.mxu0 0.0
    %707 = vmatpush1.msra.mxu0 0.0
    %708 = vmatprep.subr.mxu0 0.0
    %709 = vmatpush1.msra.mxu0 0.0
    %710 = vmatprep.subr.mxu0 0.0
    %711 = vmatpush1.msra.mxu0 0.0
    %712 = vmatprep.subr.mxu0 0.0
    %713 = vmatpush1.msra.mxu0 0.0
    %714 = vmatprep.subr.mxu0 0.0
    %715 = vmatpush1.msra.mxu0 0.0
    %716 = vmatprep.subr.mxu0 0.0
    %717 = vmatpush1.msra.mxu0 0.0
    %718 = vmatprep.subr.mxu0 0.0
    %719 = vmatpush1.msra.mxu0 0.0
    %720 = vmatprep.subr.mxu0 0.0
    %721 = vmatpush1.msra.mxu0 0.0
    %722 = vmatprep.subr.mxu0 0.0
    %723 = vmatpush1.msra.mxu0 0.0
    %724 = vmatprep.subr.mxu0 0.0
    %725 = vmatpush1.msra.mxu0 0.0
    %726 = vmatprep.subr.mxu0 0.0
    %727 = vmatpush1.msra.mxu0 0.0
    %728 = vmatprep.mubr.f32.mxu0 0.0
    %729 = vmatmul.mubr.f32.gmra.mrb[0].mxu0 %v648
    %v730 = vpop.f32.mrb[0].mxu0
    %v731 = vadd.f32 0.0, %v730
    %v732 = vpop.f32.mrb[0].mxu0
    %v733 = vadd.f32 0.0, %v732
    %734 = vdwg.mxu0
    %735 = vmatprep.subr.mxu0 %v418
    %736 = vmatpush1.msra.mxu0 %v417
    %737 = vmatprep.subr.mxu0 %v422
    %738 = vmatpush1.msra.mxu0 %v421
    %739 = vmatprep.subr.mxu0 %v426
    %740 = vmatpush1.msra.mxu0 %v425
    %741 = vmatprep.subr.mxu0 %v430
    %742 = vmatpush1.msra.mxu0 %v429
    %743 = vmatprep.subr.mxu0 %v434
    %744 = vmatpush1.msra.mxu0 %v433
    %745 = vmatprep.subr.mxu0 %v438
    %746 = vmatpush1.msra.mxu0 %v437
    %747 = vmatprep.subr.mxu0 %v442
    %748 = vmatpush1.msra.mxu0 %v441
    %749 = vmatprep.subr.mxu0 %v446
    %750 = vmatpush1.msra.mxu0 %v445
    %751 = vmatprep.subr.mxu0 %v450
    %752 = vmatpush1.msra.mxu0 %v449
    %753 = vmatprep.subr.mxu0 %v454
    %754 = vmatpush1.msra.mxu0 %v453
    %755 = vmatprep.subr.mxu0 %v458
    %756 = vmatpush1.msra.mxu0 %v457
    %757 = vmatprep.subr.mxu0 %v462
    %758 = vmatpush1.msra.mxu0 %v461
    %759 = vmatprep.subr.mxu0 %v466
    %760 = vmatpush1.msra.mxu0 %v465
    %761 = vmatprep.subr.mxu0 %v470
    %762 = vmatpush1.msra.mxu0 %v469
    %763 = vmatprep.subr.mxu0 %v474
    %764 = vmatpush1.msra.mxu0 %v473
    %765 = vmatprep.subr.mxu0 %v478
    %766 = vmatpush1.msra.mxu0 %v477
    %767 = vmatprep.subr.mxu0 0.0
    %768 = vmatpush1.msra.mxu0 0.0
    %769 = vmatprep.subr.mxu0 0.0
    %770 = vmatpush1.msra.mxu0 0.0
    %771 = vmatprep.subr.mxu0 0.0
    %772 = vmatpush1.msra.mxu0 0.0
    %773 = vmatprep.subr.mxu0 0.0
    %774 = vmatpush1.msra.mxu0 0.0
    %775 = vmatprep.subr.mxu0 0.0
    %776 = vmatpush1.msra.mxu0 0.0
    %777 = vmatprep.subr.mxu0 0.0
    %778 = vmatpush1.msra.mxu0 0.0
    %779 = vmatprep.subr.mxu0 0.0
    %780 = vmatpush1.msra.mxu0 0.0
    %781 = vmatprep.subr.mxu0 0.0
    %782 = vmatpush1.msra.mxu0 0.0
    %783 = vmatprep.subr.mxu0 0.0
    %784 = vmatpush1.msra.mxu0 0.0
    %785 = vmatprep.subr.mxu0 0.0
    %786 = vmatpush1.msra.mxu0 0.0
    %787 = vmatprep.subr.mxu0 0.0
    %788 = vmatpush1.msra.mxu0 0.0
    %789 = vmatprep.subr.mxu0 0.0
    %790 = vmatpush1.msra.mxu0 0.0
    %791 = vmatprep.subr.mxu0 0.0
    %792 = vmatpush1.msra.mxu0 0.0
    %793 = vmatprep.subr.mxu0 0.0
    %794 = vmatpush1.msra.mxu0 0.0
    %795 = vmatprep.subr.mxu0 0.0
    %796 = vmatpush1.msra.mxu0 0.0
    %797 = vmatprep.subr.mxu0 0.0
    %798 = vmatpush1.msra.mxu0 0.0
    %799 = vmatprep.mubr.f32.mxu0 0.0
    %800 = vmatmul.mubr.f32.gmra.mrb[0].mxu0 %v648
    %v801 = vpop.f32.mrb[0].mxu0
    %v802 = vadd.f32 0.0, %v801
    %v803 = vpop.f32.mrb[0].mxu0
    %v804 = vadd.f32 0.0, %v803
    %805 = vdwg.mxu0
    %v806 = vadd.f32 %v660, %v731
    %v807 = vadd.f32 %v661, %v733
    %v808 = vadd.f32 %v662, %v802
    %v809 = vadd.f32 %v663, %v804
    %v810 = vxor.u32 %v806, 2147483648
    %v811 = vmul.f32 %v810, 1.442695
    %v812 = vpow.pop %v811
    %v813 = vadd.f32 %v812, 1.0
    %v814 = vrcp.pop %v813
    %v815 = vmul.f32 1.0, %v814
    %v816 = vxor.u32 %v807, 2147483648
    %v817 = vmul.f32 %v816, 1.442695
    %v818 = vpow.pop %v817
    %v819 = vadd.f32 %v818, 1.0
    %v820 = vrcp.pop %v819
    %v821 = vmul.f32 1.0, %v820
    %v822 = vtanh.pop %v808
    %v823 = vxor.u32 %v809, 2147483648
    %v824 = vmul.f32 %v823, 1.442695
    %v825 = vpow.pop %v824
    %v826 = vadd.f32 %v825, 1.0
    %v827 = vrcp.pop %v826
    %v828 = vmul.f32 1.0, %v827
    %v829 = vmul.f32 %v821, %v646
    %v830 = vmul.f32 %v815, %v822
    %v831 = vadd.f32 %v829, %v830
    %v832 = vtanh.pop %v831
    %v833 = vmul.f32 %v828, %v832
    %s834 = scalar_lea.vmem %s1, 8
    %v835 = vld [vmem:[%s834] sm:$0xff]
    %837 = vset.pattern.permute.xlu0 0
    %838 = vperm.xlu0 %837, %v835
    %v839 = vpop.permute.xlu0 %838
    %v841 = vmul.f32 %v839, %v833
    %v842 = vadd.f32 %v656, %v841
    %s843 = smul.u32 2, 4
    %s844 = smul.addr %s843, 8
    %s845 = scalar_lea.vmem [#allocation2], %s844
    %v846 = vld [vmem:[%s845] sm:$0xff]
    %v847 = vld [vmem:[%s845 + $0x8] sm:$0xff]
    %v848 = vld [vmem:[%s845 + $0x10] sm:$0xff]
    %v849 = vld [vmem:[%s845 + $0x18] sm:$0xff]
    %850 = vmatprep.subr.mxu0 %v416
    %851 = vmatpush1.msra.mxu0 %v415
    %852 = vmatprep.subr.mxu0 %v420
    %853 = vmatpush1.msra.mxu0 %v419
    %854 = vmatprep.subr.mxu0 %v424
    %855 = vmatpush1.msra.mxu0 %v423
    %856 = vmatprep.subr.mxu0 %v428
    %857 = vmatpush1.msra.mxu0 %v427
    %858 = vmatprep.subr.mxu0 %v432
    %859 = vmatpush1.msra.mxu0 %v431
    %860 = vmatprep.subr.mxu0 %v436
    %861 = vmatpush1.msra.mxu0 %v435
    %862 = vmatprep.subr.mxu0 %v440
    %863 = vmatpush1.msra.mxu0 %v439
    %864 = vmatprep.subr.mxu0 %v444
    %865 = vmatpush1.msra.mxu0 %v443
    %866 = vmatprep.subr.mxu0 %v448
    %867 = vmatpush1.msra.mxu0 %v447
    %868 = vmatprep.subr.mxu0 %v452
    %869 = vmatpush1.msra.mxu0 %v451
    %870 = vmatprep.subr.mxu0 %v456
    %871 = vmatpush1.msra.mxu0 %v455
    %872 = vmatprep.subr.mxu0 %v460
    %873 = vmatpush1.msra.mxu0 %v459
    %874 = vmatprep.subr.mxu0 %v464
    %875 = vmatpush1.msra.mxu0 %v463
    %876 = vmatprep.subr.mxu0 %v468
    %877 = vmatpush1.msra.mxu0 %v467
    %878 = vmatprep.subr.mxu0 %v472
    %879 = vmatpush1.msra.mxu0 %v471
    %880 = vmatprep.subr.mxu0 %v476
    %881 = vmatpush1.msra.mxu0 %v475
    %882 = vmatprep.subr.mxu0 0.0
    %883 = vmatpush1.msra.mxu0 0.0
    %884 = vmatprep.subr.mxu0 0.0
    %885 = vmatpush1.msra.mxu0 0.0
    %886 = vmatprep.subr.mxu0 0.0
    %887 = vmatpush1.msra.mxu0 0.0
    %888 = vmatprep.subr.mxu0 0.0
    %889 = vmatpush1.msra.mxu0 0.0
    %890 = vmatprep.subr.mxu0 0.0
    %891 = vmatpush1.msra.mxu0 0.0
    %892 = vmatprep.subr.mxu0 0.0
    %893 = vmatpush1.msra.mxu0 0.0
    %894 = vmatprep.subr.mxu0 0.0
    %895 = vmatpush1.msra.mxu0 0.0
    %896 = vmatprep.subr.mxu0 0.0
    %897 = vmatpush1.msra.mxu0 0.0
    %898 = vmatprep.subr.mxu0 0.0
    %899 = vmatpush1.msra.mxu0 0.0
    %900 = vmatprep.subr.mxu0 0.0
    %901 = vmatpush1.msra.mxu0 0.0
    %902 = vmatprep.subr.mxu0 0.0
    %903 = vmatpush1.msra.mxu0 0.0
    %904 = vmatprep.subr.mxu0 0.0
    %905 = vmatpush1.msra.mxu0 0.0
    %906 = vmatprep.subr.mxu0 0.0
    %907 = vmatpush1.msra.mxu0 0.0
    %908 = vmatprep.subr.mxu0 0.0
    %909 = vmatpush1.msra.mxu0 0.0
    %910 = vmatprep.subr.mxu0 0.0
    %911 = vmatpush1.msra.mxu0 0.0
    %912 = vmatprep.subr.mxu0 0.0
    %913 = vmatpush1.msra.mxu0 0.0
    %914 = vmatprep.mubr.f32.mxu0 0.0
    %915 = vmatmul.mubr.f32.gmra.mrb[0].mxu0 %v833
    %v916 = vpop.f32.mrb[0].mxu0
    %v917 = vadd.f32 0.0, %v916
    %v918 = vpop.f32.mrb[0].mxu0
    %v919 = vadd.f32 0.0, %v918
    %920 = vdwg.mxu0
    %921 = vmatprep.subr.mxu0 %v418
    %922 = vmatpush1.msra.mxu0 %v417
    %923 = vmatprep.subr.mxu0 %v422
    %924 = vmatpush1.msra.mxu0 %v421
    %925 = vmatprep.subr.mxu0 %v426
    %926 = vmatpush1.msra.mxu0 %v425
    %927 = vmatprep.subr.mxu0 %v430
    %928 = vmatpush1.msra.mxu0 %v429
    %929 = vmatprep.subr.mxu0 %v434
    %930 = vmatpush1.msra.mxu0 %v433
    %931 = vmatprep.subr.mxu0 %v438
    %932 = vmatpush1.msra.mxu0 %v437
    %933 = vmatprep.subr.mxu0 %v442
    %934 = vmatpush1.msra.mxu0 %v441
    %935 = vmatprep.subr.mxu0 %v446
    %936 = vmatpush1.msra.mxu0 %v445
    %937 = vmatprep.subr.mxu0 %v450
    %938 = vmatpush1.msra.mxu0 %v449
    %939 = vmatprep.subr.mxu0 %v454
    %940 = vmatpush1.msra.mxu0 %v453
    %941 = vmatprep.subr.mxu0 %v458
    %942 = vmatpush1.msra.mxu0 %v457
    %943 = vmatprep.subr.mxu0 %v462
    %944 = vmatpush1.msra.mxu0 %v461
    %945 = vmatprep.subr.mxu0 %v466
    %946 = vmatpush1.msra.mxu0 %v465
    %947 = vmatprep.subr.mxu0 %v470
    %948 = vmatpush1.msra.mxu0 %v469
    %949 = vmatprep.subr.mxu0 %v474
    %950 = vmatpush1.msra.mxu0 %v473
    %951 = vmatprep.subr.mxu0 %v478
    %952 = vmatpush1.msra.mxu0 %v477
    %953 = vmatprep.subr.mxu0 0.0
    %954 = vmatpush1.msra.mxu0 0.0
    %955 = vmatprep.subr.mxu0 0.0
    %956 = vmatpush1.msra.mxu0 0.0
    %957 = vmatprep.subr.mxu0 0.0
    %958 = vmatpush1.msra.mxu0 0.0
    %959 = vmatprep.subr.mxu0 0.0
    %960 = vmatpush1.msra.mxu0 0.0
    %961 = vmatprep.subr.mxu0 0.0
    %962 = vmatpush1.msra.mxu0 0.0
    %963 = vmatprep.subr.mxu0 0.0
    %964 = vmatpush1.msra.mxu0 0.0
    %965 = vmatprep.subr.mxu0 0.0
    %966 = vmatpush1.msra.mxu0 0.0
    %967 = vmatprep.subr.mxu0 0.0
    %968 = vmatpush1.msra.mxu0 0.0
    %969 = vmatprep.subr.mxu0 0.0
    %970 = vmatpush1.msra.mxu0 0.0
    %971 = vmatprep.subr.mxu0 0.0
    %972 = vmatpush1.msra.mxu0 0.0
    %973 = vmatprep.subr.mxu0 0.0
    %974 = vmatpush1.msra.mxu0 0.0
    %975 = vmatprep.subr.mxu0 0.0
    %976 = vmatpush1.msra.mxu0 0.0
    %977 = vmatprep.subr.mxu0 0.0
    %978 = vmatpush1.msra.mxu0 0.0
    %979 = vmatprep.subr.mxu0 0.0
    %980 = vmatpush1.msra.mxu0 0.0
    %981 = vmatprep.subr.mxu0 0.0
    %982 = vmatpush1.msra.mxu0 0.0
    %983 = vmatprep.subr.mxu0 0.0
    %984 = vmatpush1.msra.mxu0 0.0
    %985 = vmatprep.mubr.f32.mxu0 0.0
    %986 = vmatmul.mubr.f32.gmra.mrb[0].mxu0 %v833
    %v987 = vpop.f32.mrb[0].mxu0
    %v988 = vadd.f32 0.0, %v987
    %v989 = vpop.f32.mrb[0].mxu0
    %v990 = vadd.f32 0.0, %v989
    %991 = vdwg.mxu0
    %v992 = vadd.f32 %v846, %v917
    %v993 = vadd.f32 %v847, %v919
    %v994 = vadd.f32 %v848, %v988
    %v995 = vadd.f32 %v849, %v990
    %v996 = vxor.u32 %v992, 2147483648
    %v997 = vmul.f32 %v996, 1.442695
    %v998 = vpow.pop %v997
    %v999 = vadd.f32 %v998, 1.0
    %v1000 = vrcp.pop %v999
    %v1001 = vmul.f32 1.0, %v1000
    %v1002 = vxor.u32 %v993, 2147483648
    %v1003 = vmul.f32 %v1002, 1.442695
    %v1004 = vpow.pop %v1003
    %v1005 = vadd.f32 %v1004, 1.0
    %v1006 = vrcp.pop %v1005
    %v1007 = vmul.f32 1.0, %v1006
    %v1008 = vtanh.pop %v994
    %v1009 = vxor.u32 %v995, 2147483648
    %v1010 = vmul.f32 %v1009, 1.442695
    %v1011 = vpow.pop %v1010
    %v1012 = vadd.f32 %v1011, 1.0
    %v1013 = vrcp.pop %v1012
    %v1014 = vmul.f32 1.0, %v1013
    %v1015 = vmul.f32 %v1007, %v831
    %v1016 = vmul.f32 %v1001, %v1008
    %v1017 = vadd.f32 %v1015, %v1016
    %v1018 = vtanh.pop %v1017
    %v1019 = vmul.f32 %v1014, %v1018
    %s1020 = scalar_lea.vmem %s1, 16
    %v1021 = vld [vmem:[%s1020] sm:$0xff]
    %1023 = vset.pattern.permute.xlu0 0
    %1024 = vperm.xlu0 %1023, %v1021
    %v1025 = vpop.permute.xlu0 %1024
    %v1027 = vmul.f32 %v1025, %v1019
    %v1028 = vadd.f32 %v842, %v1027
    %s1029 = smul.u32 3, 4
    %s1030 = smul.addr %s1029, 8
    %s1031 = scalar_lea.vmem [#allocation2], %s1030
    %v1032 = vld [vmem:[%s1031] sm:$0xff]
    %v1033 = vld [vmem:[%s1031 + $0x8] sm:$0xff]
    %v1034 = vld [vmem:[%s1031 + $0x10] sm:$0xff]
    %v1035 = vld [vmem:[%s1031 + $0x18] sm:$0xff]
    %1036 = vmatprep.subr.mxu0 %v416
    %1037 = vmatpush1.msra.mxu0 %v415
    %1038 = vmatprep.subr.mxu0 %v420
    %1039 = vmatpush1.msra.mxu0 %v419
    %1040 = vmatprep.subr.mxu0 %v424
    %1041 = vmatpush1.msra.mxu0 %v423
    %1042 = vmatprep.subr.mxu0 %v428
    %1043 = vmatpush1.msra.mxu0 %v427
    %1044 = vmatprep.subr.mxu0 %v432
    %1045 = vmatpush1.msra.mxu0 %v431
    %1046 = vmatprep.subr.mxu0 %v436
    %1047 = vmatpush1.msra.mxu0 %v435
    %1048 = vmatprep.subr.mxu0 %v440
    %1049 = vmatpush1.msra.mxu0 %v439
    %1050 = vmatprep.subr.mxu0 %v444
    %1051 = vmatpush1.msra.mxu0 %v443
    %1052 = vmatprep.subr.mxu0 %v448
    %1053 = vmatpush1.msra.mxu0 %v447
    %1054 = vmatprep.subr.mxu0 %v452
    %1055 = vmatpush1.msra.mxu0 %v451
    %1056 = vmatprep.subr.mxu0 %v456
    %1057 = vmatpush1.msra.mxu0 %v455
    %1058 = vmatprep.subr.mxu0 %v460
    %1059 = vmatpush1.msra.mxu0 %v459
    %1060 = vmatprep.subr.mxu0 %v464
    %1061 = vmatpush1.msra.mxu0 %v463
    %1062 = vmatprep.subr.mxu0 %v468
    %1063 = vmatpush1.msra.mxu0 %v467
    %1064 = vmatprep.subr.mxu0 %v472
    %1065 = vmatpush1.msra.mxu0 %v471
    %1066 = vmatprep.subr.mxu0 %v476
    %1067 = vmatpush1.msra.mxu0 %v475
    %1068 = vmatprep.subr.mxu0 0.0
    %1069 = vmatpush1.msra.mxu0 0.0
    %1070 = vmatprep.subr.mxu0 0.0
    %1071 = vmatpush1.msra.mxu0 0.0
    %1072 = vmatprep.subr.mxu0 0.0
    %1073 = vmatpush1.msra.mxu0 0.0
    %1074 = vmatprep.subr.mxu0 0.0
    %1075 = vmatpush1.msra.mxu0 0.0
    %1076 = vmatprep.subr.mxu0 0.0
    %1077 = vmatpush1.msra.mxu0 0.0
    %1078 = vmatprep.subr.mxu0 0.0
    %1079 = vmatpush1.msra.mxu0 0.0
    %1080 = vmatprep.subr.mxu0 0.0
    %1081 = vmatpush1.msra.mxu0 0.0
    %1082 = vmatprep.subr.mxu0 0.0
    %1083 = vmatpush1.msra.mxu0 0.0
    %1084 = vmatprep.subr.mxu0 0.0
    %1085 = vmatpush1.msra.mxu0 0.0
    %1086 = vmatprep.subr.mxu0 0.0
    %1087 = vmatpush1.msra.mxu0 0.0
    %1088 = vmatprep.subr.mxu0 0.0
    %1089 = vmatpush1.msra.mxu0 0.0
    %1090 = vmatprep.subr.mxu0 0.0
    %1091 = vmatpush1.msra.mxu0 0.0
    %1092 = vmatprep.subr.mxu0 0.0
    %1093 = vmatpush1.msra.mxu0 0.0
    %1094 = vmatprep.subr.mxu0 0.0
    %1095 = vmatpush1.msra.mxu0 0.0
    %1096 = vmatprep.subr.mxu0 0.0
    %1097 = vmatpush1.msra.mxu0 0.0
    %1098 = vmatprep.subr.mxu0 0.0
    %1099 = vmatpush1.msra.mxu0 0.0
    %1100 = vmatprep.mubr.f32.mxu0 0.0
    %1101 = vmatmul.mubr.f32.gmra.mrb[0].mxu0 %v1019
    %v1102 = vpop.f32.mrb[0].mxu0
    %v1103 = vadd.f32 0.0, %v1102
    %v1104 = vpop.f32.mrb[0].mxu0
    %v1105 = vadd.f32 0.0, %v1104
    %1106 = vdwg.mxu0
    %1107 = vmatprep.subr.mxu0 %v418
    %1108 = vmatpush1.msra.mxu0 %v417
    %1109 = vmatprep.subr.mxu0 %v422
    %1110 = vmatpush1.msra.mxu0 %v421
    %1111 = vmatprep.subr.mxu0 %v426
    %1112 = vmatpush1.msra.mxu0 %v425
    %1113 = vmatprep.subr.mxu0 %v430
    %1114 = vmatpush1.msra.mxu0 %v429
    %1115 = vmatprep.subr.mxu0 %v434
    %1116 = vmatpush1.msra.mxu0 %v433
    %1117 = vmatprep.subr.mxu0 %v438
    %1118 = vmatpush1.msra.mxu0 %v437
    %1119 = vmatprep.subr.mxu0 %v442
    %1120 = vmatpush1.msra.mxu0 %v441
    %1121 = vmatprep.subr.mxu0 %v446
    %1122 = vmatpush1.msra.mxu0 %v445
    %1123 = vmatprep.subr.mxu0 %v450
    %1124 = vmatpush1.msra.mxu0 %v449
    %1125 = vmatprep.subr.mxu0 %v454
    %1126 = vmatpush1.msra.mxu0 %v453
    %1127 = vmatprep.subr.mxu0 %v458
    %1128 = vmatpush1.msra.mxu0 %v457
    %1129 = vmatprep.subr.mxu0 %v462
    %1130 = vmatpush1.msra.mxu0 %v461
    %1131 = vmatprep.subr.mxu0 %v466
    %1132 = vmatpush1.msra.mxu0 %v465
    %1133 = vmatprep.subr.mxu0 %v470
    %1134 = vmatpush1.msra.mxu0 %v469
    %1135 = vmatprep.subr.mxu0 %v474
    %1136 = vmatpush1.msra.mxu0 %v473
    %1137 = vmatprep.subr.mxu0 %v478
    %1138 = vmatpush1.msra.mxu0 %v477
    %1139 = vmatprep.subr.mxu0 0.0
    %1140 = vmatpush1.msra.mxu0 0.0
    %1141 = vmatprep.subr.mxu0 0.0
    %1142 = vmatpush1.msra.mxu0 0.0
    %1143 = vmatprep.subr.mxu0 0.0
    %1144 = vmatpush1.msra.mxu0 0.0
    %1145 = vmatprep.subr.mxu0 0.0
    %1146 = vmatpush1.msra.mxu0 0.0
    %1147 = vmatprep.subr.mxu0 0.0
    %1148 = vmatpush1.msra.mxu0 0.0
    %1149 = vmatprep.subr.mxu0 0.0
    %1150 = vmatpush1.msra.mxu0 0.0
    %1151 = vmatprep.subr.mxu0 0.0
    %1152 = vmatpush1.msra.mxu0 0.0
    %1153 = vmatprep.subr.mxu0 0.0
    %1154 = vmatpush1.msra.mxu0 0.0
    %1155 = vmatprep.subr.mxu0 0.0
    %1156 = vmatpush1.msra.mxu0 0.0
    %1157 = vmatprep.subr.mxu0 0.0
    %1158 = vmatpush1.msra.mxu0 0.0
    %1159 = vmatprep.subr.mxu0 0.0
    %1160 = vmatpush1.msra.mxu0 0.0
    %1161 = vmatprep.subr.mxu0 0.0
    %1162 = vmatpush1.msra.mxu0 0.0
    %1163 = vmatprep.subr.mxu0 0.0
    %1164 = vmatpush1.msra.mxu0 0.0
    %1165 = vmatprep.subr.mxu0 0.0
    %1166 = vmatpush1.msra.mxu0 0.0
    %1167 = vmatprep.subr.mxu0 0.0
    %1168 = vmatpush1.msra.mxu0 0.0
    %1169 = vmatprep.subr.mxu0 0.0
    %1170 = vmatpush1.msra.mxu0 0.0
    %1171 = vmatprep.mubr.f32.mxu0 0.0
    %1172 = vmatmul.mubr.f32.gmra.mrb[0].mxu0 %v1019
    %v1173 = vpop.f32.mrb[0].mxu0
    %v1174 = vadd.f32 0.0, %v1173
    %v1175 = vpop.f32.mrb[0].mxu0
    %v1176 = vadd.f32 0.0, %v1175
    %1177 = vdwg.mxu0
    %v1178 = vadd.f32 %v1032, %v1103
    %v1179 = vadd.f32 %v1033, %v1105
    %v1180 = vadd.f32 %v1034, %v1174
    %v1181 = vadd.f32 %v1035, %v1176
    %v1182 = vxor.u32 %v1178, 2147483648
    %v1183 = vmul.f32 %v1182, 1.442695
    %v1184 = vpow.pop %v1183
    %v1185 = vadd.f32 %v1184, 1.0
    %v1186 = vrcp.pop %v1185
    %v1187 = vmul.f32 1.0, %v1186
    %v1188 = vxor.u32 %v1179, 2147483648
    %v1189 = vmul.f32 %v1188, 1.442695
    %v1190 = vpow.pop %v1189
    %v1191 = vadd.f32 %v1190, 1.0
    %v1192 = vrcp.pop %v1191
    %v1193 = vmul.f32 1.0, %v1192
    %v1194 = vtanh.pop %v1180
    %v1195 = vxor.u32 %v1181, 2147483648
    %v1196 = vmul.f32 %v1195, 1.442695
    %v1197 = vpow.pop %v1196
    %v1198 = vadd.f32 %v1197, 1.0
    %v1199 = vrcp.pop %v1198
    %v1200 = vmul.f32 1.0, %v1199
    %v1201 = vmul.f32 %v1193, %v1017
    %v1202 = vmul.f32 %v1187, %v1194
    %v1203 = vadd.f32 %v1201, %v1202
    %v1204 = vtanh.pop %v1203
    %v1205 = vmul.f32 %v1200, %v1204
    %s1206 = scalar_lea.vmem %s1, 24
    %v1207 = vld [vmem:[%s1206] sm:$0xff]
    %1209 = vset.pattern.permute.xlu0 0
    %1210 = vperm.xlu0 %1209, %v1207
    %v1211 = vpop.permute.xlu0 %1210
    %v1213 = vmul.f32 %v1211, %v1205
    %v1214 = vadd.f32 %v1028, %v1213
    %s1215 = smul.u32 4, 4
    %s1216 = smul.addr %s1215, 8
    %s1217 = scalar_lea.vmem [#allocation2], %s1216
    %v1218 = vld [vmem:[%s1217] sm:$0xff]
    %v1219 = vld [vmem:[%s1217 + $0x8] sm:$0xff]
    %v1220 = vld [vmem:[%s1217 + $0x10] sm:$0xff]
    %v1221 = vld [vmem:[%s1217 + $0x18] sm:$0xff]
    %1222 = vmatprep.subr.mxu0 %v416
    %1223 = vmatpush1.msra.mxu0 %v415
    %1224 = vmatprep.subr.mxu0 %v420
    %1225 = vmatpush1.msra.mxu0 %v419
    %1226 = vmatprep.subr.mxu0 %v424
    %1227 = vmatpush1.msra.mxu0 %v423
    %1228 = vmatprep.subr.mxu0 %v428
    %1229 = vmatpush1.msra.mxu0 %v427
    %1230 = vmatprep.subr.mxu0 %v432
    %1231 = vmatpush1.msra.mxu0 %v431
    %1232 = vmatprep.subr.mxu0 %v436
    %1233 = vmatpush1.msra.mxu0 %v435
    %1234 = vmatprep.subr.mxu0 %v440
    %1235 = vmatpush1.msra.mxu0 %v439
    %1236 = vmatprep.subr.mxu0 %v444
    %1237 = vmatpush1.msra.mxu0 %v443
    %1238 = vmatprep.subr.mxu0 %v448
    %1239 = vmatpush1.msra.mxu0 %v447
    %1240 = vmatprep.subr.mxu0 %v452
    %1241 = vmatpush1.msra.mxu0 %v451
    %1242 = vmatprep.subr.mxu0 %v456
    %1243 = vmatpush1.msra.mxu0 %v455
    %1244 = vmatprep.subr.mxu0 %v460
    %1245 = vmatpush1.msra.mxu0 %v459
    %1246 = vmatprep.subr.mxu0 %v464
    %1247 = vmatpush1.msra.mxu0 %v463
    %1248 = vmatprep.subr.mxu0 %v468
    %1249 = vmatpush1.msra.mxu0 %v467
    %1250 = vmatprep.subr.mxu0 %v472
    %1251 = vmatpush1.msra.mxu0 %v471
    %1252 = vmatprep.subr.mxu0 %v476
    %1253 = vmatpush1.msra.mxu0 %v475
    %1254 = vmatprep.subr.mxu0 0.0
    %1255 = vmatpush1.msra.mxu0 0.0
    %1256 = vmatprep.subr.mxu0 0.0
    %1257 = vmatpush1.msra.mxu0 0.0
    %1258 = vmatprep.subr.mxu0 0.0
    %1259 = vmatpush1.msra.mxu0 0.0
    %1260 = vmatprep.subr.mxu0 0.0
    %1261 = vmatpush1.msra.mxu0 0.0
    %1262 = vmatprep.subr.mxu0 0.0
    %1263 = vmatpush1.msra.mxu0 0.0
    %1264 = vmatprep.subr.mxu0 0.0
    %1265 = vmatpush1.msra.mxu0 0.0
    %1266 = vmatprep.subr.mxu0 0.0
    %1267 = vmatpush1.msra.mxu0 0.0
    %1268 = vmatprep.subr.mxu0 0.0
    %1269 = vmatpush1.msra.mxu0 0.0
    %1270 = vmatprep.subr.mxu0 0.0
    %1271 = vmatpush1.msra.mxu0 0.0
    %1272 = vmatprep.subr.mxu0 0.0
    %1273 = vmatpush1.msra.mxu0 0.0
    %1274 = vmatprep.subr.mxu0 0.0
    %1275 = vmatpush1.msra.mxu0 0.0
    %1276 = vmatprep.subr.mxu0 0.0
    %1277 = vmatpush1.msra.mxu0 0.0
    %1278 = vmatprep.subr.mxu0 0.0
    %1279 = vmatpush1.msra.mxu0 0.0
    %1280 = vmatprep.subr.mxu0 0.0
    %1281 = vmatpush1.msra.mxu0 0.0
    %1282 = vmatprep.subr.mxu0 0.0
    %1283 = vmatpush1.msra.mxu0 0.0
    %1284 = vmatprep.subr.mxu0 0.0
    %1285 = vmatpush1.msra.mxu0 0.0
    %1286 = vmatprep.mubr.f32.mxu0 0.0
    %1287 = vmatmul.mubr.f32.gmra.mrb[0].mxu0 %v1205
    %v1288 = vpop.f32.mrb[0].mxu0
    %v1289 = vadd.f32 0.0, %v1288
    %v1290 = vpop.f32.mrb[0].mxu0
    %v1291 = vadd.f32 0.0, %v1290
    %1292 = vdwg.mxu0
    %1293 = vmatprep.subr.mxu0 %v418
    %1294 = vmatpush1.msra.mxu0 %v417
    %1295 = vmatprep.subr.mxu0 %v422
    %1296 = vmatpush1.msra.mxu0 %v421
    %1297 = vmatprep.subr.mxu0 %v426
    %1298 = vmatpush1.msra.mxu0 %v425
    %1299 = vmatprep.subr.mxu0 %v430
    %1300 = vmatpush1.msra.mxu0 %v429
    %1301 = vmatprep.subr.mxu0 %v434
    %1302 = vmatpush1.msra.mxu0 %v433
    %1303 = vmatprep.subr.mxu0 %v438
    %1304 = vmatpush1.msra.mxu0 %v437
    %1305 = vmatprep.subr.mxu0 %v442
    %1306 = vmatpush1.msra.mxu0 %v441
    %1307 = vmatprep.subr.mxu0 %v446
    %1308 = vmatpush1.msra.mxu0 %v445
    %1309 = vmatprep.subr.mxu0 %v450
    %1310 = vmatpush1.msra.mxu0 %v449
    %1311 = vmatprep.subr.mxu0 %v454
    %1312 = vmatpush1.msra.mxu0 %v453
    %1313 = vmatprep.subr.mxu0 %v458
    %1314 = vmatpush1.msra.mxu0 %v457
    %1315 = vmatprep.subr.mxu0 %v462
    %1316 = vmatpush1.msra.mxu0 %v461
    %1317 = vmatprep.subr.mxu0 %v466
    %1318 = vmatpush1.msra.mxu0 %v465
    %1319 = vmatprep.subr.mxu0 %v470
    %1320 = vmatpush1.msra.mxu0 %v469
    %1321 = vmatprep.subr.mxu0 %v474
    %1322 = vmatpush1.msra.mxu0 %v473
    %1323 = vmatprep.subr.mxu0 %v478
    %1324 = vmatpush1.msra.mxu0 %v477
    %1325 = vmatprep.subr.mxu0 0.0
    %1326 = vmatpush1.msra.mxu0 0.0
    %1327 = vmatprep.subr.mxu0 0.0
    %1328 = vmatpush1.msra.mxu0 0.0
    %1329 = vmatprep.subr.mxu0 0.0
    %1330 = vmatpush1.msra.mxu0 0.0
    %1331 = vmatprep.subr.mxu0 0.0
    %1332 = vmatpush1.msra.mxu0 0.0
    %1333 = vmatprep.subr.mxu0 0.0
    %1334 = vmatpush1.msra.mxu0 0.0
    %1335 = vmatprep.subr.mxu0 0.0
    %1336 = vmatpush1.msra.mxu0 0.0
    %1337 = vmatprep.subr.mxu0 0.0
    %1338 = vmatpush1.msra.mxu0 0.0
    %1339 = vmatprep.subr.mxu0 0.0
    %1340 = vmatpush1.msra.mxu0 0.0
    %1341 = vmatprep.subr.mxu0 0.0
    %1342 = vmatpush1.msra.mxu0 0.0
    %1343 = vmatprep.subr.mxu0 0.0
    %1344 = vmatpush1.msra.mxu0 0.0
    %1345 = vmatprep.subr.mxu0 0.0
    %1346 = vmatpush1.msra.mxu0 0.0
    %1347 = vmatprep.subr.mxu0 0.0
    %1348 = vmatpush1.msra.mxu0 0.0
    %1349 = vmatprep.subr.mxu0 0.0
    %1350 = vmatpush1.msra.mxu0 0.0
    %1351 = vmatprep.subr.mxu0 0.0
    %1352 = vmatpush1.msra.mxu0 0.0
    %1353 = vmatprep.subr.mxu0 0.0
    %1354 = vmatpush1.msra.mxu0 0.0
    %1355 = vmatprep.subr.mxu0 0.0
    %1356 = vmatpush1.msra.mxu0 0.0
    %1357 = vmatprep.mubr.f32.mxu0 0.0
    %1358 = vmatmul.mubr.f32.gmra.mrb[0].mxu0 %v1205
    %v1359 = vpop.f32.mrb[0].mxu0
    %v1360 = vadd.f32 0.0, %v1359
    %v1361 = vpop.f32.mrb[0].mxu0
    %v1362 = vadd.f32 0.0, %v1361
    %1363 = vdwg.mxu0
    %v1364 = vadd.f32 %v1218, %v1289
    %v1365 = vadd.f32 %v1219, %v1291
    %v1366 = vadd.f32 %v1220, %v1360
    %v1367 = vadd.f32 %v1221, %v1362
    %v1368 = vxor.u32 %v1364, 2147483648
    %v1369 = vmul.f32 %v1368, 1.442695
    %v1370 = vpow.pop %v1369
    %v1371 = vadd.f32 %v1370, 1.0
    %v1372 = vrcp.pop %v1371
    %v1373 = vmul.f32 1.0, %v1372
    %v1374 = vxor.u32 %v1365, 2147483648
    %v1375 = vmul.f32 %v1374, 1.442695
    %v1376 = vpow.pop %v1375
    %v1377 = vadd.f32 %v1376, 1.0
    %v1378 = vrcp.pop %v1377
    %v1379 = vmul.f32 1.0, %v1378
    %v1380 = vtanh.pop %v1366
    %v1381 = vxor.u32 %v1367, 2147483648
    %v1382 = vmul.f32 %v1381, 1.442695
    %v1383 = vpow.pop %v1382
    %v1384 = vadd.f32 %v1383, 1.0
    %v1385 = vrcp.pop %v1384
    %v1386 = vmul.f32 1.0, %v1385
    %v1387 = vmul.f32 %v1379, %v1203
    %v1388 = vmul.f32 %v1373, %v1380
    %v1389 = vadd.f32 %v1387, %v1388
    %v1390 = vtanh.pop %v1389
    %v1391 = vmul.f32 %v1386, %v1390
    %s1392 = scalar_lea.vmem %s1, 32
    %v1393 = vld [vmem:[%s1392] sm:$0xff]
    %1395 = vset.pattern.permute.xlu0 0
    %1396 = vperm.xlu0 %1395, %v1393
    %v1397 = vpop.permute.xlu0 %1396
    %v1399 = vmul.f32 %v1397, %v1391
    %v1400 = vadd.f32 %v1214, %v1399
    %s1401 = smul.u32 5, 4
    %s1402 = smul.addr %s1401, 8
    %s1403 = scalar_lea.vmem [#allocation2], %s1402
    %v1404 = vld [vmem:[%s1403] sm:$0xff]
    %v1405 = vld [vmem:[%s1403 + $0x8] sm:$0xff]
    %v1406 = vld [vmem:[%s1403 + $0x10] sm:$0xff]
    %v1407 = vld [vmem:[%s1403 + $0x18] sm:$0xff]
    %1408 = vmatprep.subr.mxu0 %v416
    %1409 = vmatpush1.msra.mxu0 %v415
    %1410 = vmatprep.subr.mxu0 %v420
    %1411 = vmatpush1.msra.mxu0 %v419
    %1412 = vmatprep.subr.mxu0 %v424
    %1413 = vmatpush1.msra.mxu0 %v423
    %1414 = vmatprep.subr.mxu0 %v428
    %1415 = vmatpush1.msra.mxu0 %v427
    %1416 = vmatprep.subr.mxu0 %v432
    %1417 = vmatpush1.msra.mxu0 %v431
    %1418 = vmatprep.subr.mxu0 %v436
    %1419 = vmatpush1.msra.mxu0 %v435
    %1420 = vmatprep.subr.mxu0 %v440
    %1421 = vmatpush1.msra.mxu0 %v439
    %1422 = vmatprep.subr.mxu0 %v444
    %1423 = vmatpush1.msra.mxu0 %v443
    %1424 = vmatprep.subr.mxu0 %v448
    %1425 = vmatpush1.msra.mxu0 %v447
    %1426 = vmatprep.subr.mxu0 %v452
    %1427 = vmatpush1.msra.mxu0 %v451
    %1428 = vmatprep.subr.mxu0 %v456
    %1429 = vmatpush1.msra.mxu0 %v455
    %1430 = vmatprep.subr.mxu0 %v460
    %1431 = vmatpush1.msra.mxu0 %v459
    %1432 = vmatprep.subr.mxu0 %v464
    %1433 = vmatpush1.msra.mxu0 %v463
    %1434 = vmatprep.subr.mxu0 %v468
    %1435 = vmatpush1.msra.mxu0 %v467
    %1436 = vmatprep.subr.mxu0 %v472
    %1437 = vmatpush1.msra.mxu0 %v471
    %1438 = vmatprep.subr.mxu0 %v476
    %1439 = vmatpush1.msra.mxu0 %v475
    %1440 = vmatprep.subr.mxu0 0.0
    %1441 = vmatpush1.msra.mxu0 0.0
    %1442 = vmatprep.subr.mxu0 0.0
    %1443 = vmatpush1.msra.mxu0 0.0
    %1444 = vmatprep.subr.mxu0 0.0
    %1445 = vmatpush1.msra.mxu0 0.0
    %1446 = vmatprep.subr.mxu0 0.0
    %1447 = vmatpush1.msra.mxu0 0.0
    %1448 = vmatprep.subr.mxu0 0.0
    %1449 = vmatpush1.msra.mxu0 0.0
    %1450 = vmatprep.subr.mxu0 0.0
    %1451 = vmatpush1.msra.mxu0 0.0
    %1452 = vmatprep.subr.mxu0 0.0
    %1453 = vmatpush1.msra.mxu0 0.0
    %1454 = vmatprep.subr.mxu0 0.0
    %1455 = vmatpush1.msra.mxu0 0.0
    %1456 = vmatprep.subr.mxu0 0.0
    %1457 = vmatpush1.msra.mxu0 0.0
    %1458 = vmatprep.subr.mxu0 0.0
    %1459 = vmatpush1.msra.mxu0 0.0
    %1460 = vmatprep.subr.mxu0 0.0
    %1461 = vmatpush1.msra.mxu0 0.0
    %1462 = vmatprep.subr.mxu0 0.0
    %1463 = vmatpush1.msra.mxu0 0.0
    %1464 = vmatprep.subr.mxu0 0.0
    %1465 = vmatpush1.msra.mxu0 0.0
    %1466 = vmatprep.subr.mxu0 0.0
    %1467 = vmatpush1.msra.mxu0 0.0
    %1468 = vmatprep.subr.mxu0 0.0
    %1469 = vmatpush1.msra.mxu0 0.0
    %1470 = vmatprep.subr.mxu0 0.0
    %1471 = vmatpush1.msra.mxu0 0.0
    %1472 = vmatprep.mubr.f32.mxu0 0.0
    %1473 = vmatmul.mubr.f32.gmra.mrb[0].mxu0 %v1391
    %v1474 = vpop.f32.mrb[0].mxu0
    %v1475 = vadd.f32 0.0, %v1474
    %v1476 = vpop.f32.mrb[0].mxu0
    %v1477 = vadd.f32 0.0, %v1476
    %1478 = vdwg.mxu0
    %1479 = vmatprep.subr.mxu0 %v418
    %1480 = vmatpush1.msra.mxu0 %v417
    %1481 = vmatprep.subr.mxu0 %v422
    %1482 = vmatpush1.msra.mxu0 %v421
    %1483 = vmatprep.subr.mxu0 %v426
    %1484 = vmatpush1.msra.mxu0 %v425
    %1485 = vmatprep.subr.mxu0 %v430
    %1486 = vmatpush1.msra.mxu0 %v429
    %1487 = vmatprep.subr.mxu0 %v434
    %1488 = vmatpush1.msra.mxu0 %v433
    %1489 = vmatprep.subr.mxu0 %v438
    %1490 = vmatpush1.msra.mxu0 %v437
    %1491 = vmatprep.subr.mxu0 %v442
    %1492 = vmatpush1.msra.mxu0 %v441
    %1493 = vmatprep.subr.mxu0 %v446
    %1494 = vmatpush1.msra.mxu0 %v445
    %1495 = vmatprep.subr.mxu0 %v450
    %1496 = vmatpush1.msra.mxu0 %v449
    %1497 = vmatprep.subr.mxu0 %v454
    %1498 = vmatpush1.msra.mxu0 %v453
    %1499 = vmatprep.subr.mxu0 %v458
    %1500 = vmatpush1.msra.mxu0 %v457
    %1501 = vmatprep.subr.mxu0 %v462
    %1502 = vmatpush1.msra.mxu0 %v461
    %1503 = vmatprep.subr.mxu0 %v466
    %1504 = vmatpush1.msra.mxu0 %v465
    %1505 = vmatprep.subr.mxu0 %v470
    %1506 = vmatpush1.msra.mxu0 %v469
    %1507 = vmatprep.subr.mxu0 %v474
    %1508 = vmatpush1.msra.mxu0 %v473
    %1509 = vmatprep.subr.mxu0 %v478
    %1510 = vmatpush1.msra.mxu0 %v477
    %1511 = vmatprep.subr.mxu0 0.0
    %1512 = vmatpush1.msra.mxu0 0.0
    %1513 = vmatprep.subr.mxu0 0.0
    %1514 = vmatpush1.msra.mxu0 0.0
    %1515 = vmatprep.subr.mxu0 0.0
    %1516 = vmatpush1.msra.mxu0 0.0
    %1517 = vmatprep.subr.mxu0 0.0
    %1518 = vmatpush1.msra.mxu0 0.0
    %1519 = vmatprep.subr.mxu0 0.0
    %1520 = vmatpush1.msra.mxu0 0.0
    %1521 = vmatprep.subr.mxu0 0.0
    %1522 = vmatpush1.msra.mxu0 0.0
    %1523 = vmatprep.subr.mxu0 0.0
    %1524 = vmatpush1.msra.mxu0 0.0
    %1525 = vmatprep.subr.mxu0 0.0
    %1526 = vmatpush1.msra.mxu0 0.0
    %1527 = vmatprep.subr.mxu0 0.0
    %1528 = vmatpush1.msra.mxu0 0.0
    %1529 = vmatprep.subr.mxu0 0.0
    %1530 = vmatpush1.msra.mxu0 0.0
    %1531 = vmatprep.subr.mxu0 0.0
    %1532 = vmatpush1.msra.mxu0 0.0
    %1533 = vmatprep.subr.mxu0 0.0
    %1534 = vmatpush1.msra.mxu0 0.0
    %1535 = vmatprep.subr.mxu0 0.0
    %1536 = vmatpush1.msra.mxu0 0.0
    %1537 = vmatprep.subr.mxu0 0.0
    %1538 = vmatpush1.msra.mxu0 0.0
    %1539 = vmatprep.subr.mxu0 0.0
    %1540 = vmatpush1.msra.mxu0 0.0
    %1541 = vmatprep.subr.mxu0 0.0
    %1542 = vmatpush1.msra.mxu0 0.0
    %1543 = vmatprep.mubr.f32.mxu0 0.0
    %1544 = vmatmul.mubr.f32.gmra.mrb[0].mxu0 %v1391
    %v1545 = vpop.f32.mrb[0].mxu0
    %v1546 = vadd.f32 0.0, %v1545
    %v1547 = vpop.f32.mrb[0].mxu0
    %v1548 = vadd.f32 0.0, %v1547
    %1549 = vdwg.mxu0
    %v1550 = vadd.f32 %v1404, %v1475
    %v1551 = vadd.f32 %v1405, %v1477
    %v1552 = vadd.f32 %v1406, %v1546
    %v1553 = vadd.f32 %v1407, %v1548
    %v1554 = vxor.u32 %v1550, 2147483648
    %v1555 = vmul.f32 %v1554, 1.442695
    %v1556 = vpow.pop %v1555
    %v1557 = vadd.f32 %v1556, 1.0
    %v1558 = vrcp.pop %v1557
    %v1559 = vmul.f32 1.0, %v1558
    %v1560 = vxor.u32 %v1551, 2147483648
    %v1561 = vmul.f32 %v1560, 1.442695
    %v1562 = vpow.pop %v1561
    %v1563 = vadd.f32 %v1562, 1.0
    %v1564 = vrcp.pop %v1563
    %v1565 = vmul.f32 1.0, %v1564
    %v1566 = vtanh.pop %v1552
    %v1567 = vxor.u32 %v1553, 2147483648
    %v1568 = vmul.f32 %v1567, 1.442695
    %v1569 = vpow.pop %v1568
    %v1570 = vadd.f32 %v1569, 1.0
    %v1571 = vrcp.pop %v1570
    %v1572 = vmul.f32 1.0, %v1571
    %v1573 = vmul.f32 %v1565, %v1389
    %v1574 = vmul.f32 %v1559, %v1566
    %v1575 = vadd.f32 %v1573, %v1574
    %v1576 = vtanh.pop %v1575
    %v1577 = vmul.f32 %v1572, %v1576
    %s1578 = scalar_lea.vmem %s1, 40
    %v1579 = vld [vmem:[%s1578] sm:$0xff]
    %1581 = vset.pattern.permute.xlu0 0
    %1582 = vperm.xlu0 %1581, %v1579
    %v1583 = vpop.permute.xlu0 %1582
    %v1585 = vmul.f32 %v1583, %v1577
    %v1586 = vadd.f32 %v1400, %v1585
    %s1587 = smul.u32 6, 4
    %s1588 = smul.addr %s1587, 8
    %s1589 = scalar_lea.vmem [#allocation2], %s1588
    %v1590 = vld [vmem:[%s1589] sm:$0xff]
    %v1591 = vld [vmem:[%s1589 + $0x8] sm:$0xff]
    %v1592 = vld [vmem:[%s1589 + $0x10] sm:$0xff]
    %v1593 = vld [vmem:[%s1589 + $0x18] sm:$0xff]
    %1594 = vmatprep.subr.mxu0 %v416
    %1595 = vmatpush1.msra.mxu0 %v415
    %1596 = vmatprep.subr.mxu0 %v420
    %1597 = vmatpush1.msra.mxu0 %v419
    %1598 = vmatprep.subr.mxu0 %v424
    %1599 = vmatpush1.msra.mxu0 %v423
    %1600 = vmatprep.subr.mxu0 %v428
    %1601 = vmatpush1.msra.mxu0 %v427
    %1602 = vmatprep.subr.mxu0 %v432
    %1603 = vmatpush1.msra.mxu0 %v431
    %1604 = vmatprep.subr.mxu0 %v436
    %1605 = vmatpush1.msra.mxu0 %v435
    %1606 = vmatprep.subr.mxu0 %v440
    %1607 = vmatpush1.msra.mxu0 %v439
    %1608 = vmatprep.subr.mxu0 %v444
    %1609 = vmatpush1.msra.mxu0 %v443
    %1610 = vmatprep.subr.mxu0 %v448
    %1611 = vmatpush1.msra.mxu0 %v447
    %1612 = vmatprep.subr.mxu0 %v452
    %1613 = vmatpush1.msra.mxu0 %v451
    %1614 = vmatprep.subr.mxu0 %v456
    %1615 = vmatpush1.msra.mxu0 %v455
    %1616 = vmatprep.subr.mxu0 %v460
    %1617 = vmatpush1.msra.mxu0 %v459
    %1618 = vmatprep.subr.mxu0 %v464
    %1619 = vmatpush1.msra.mxu0 %v463
    %1620 = vmatprep.subr.mxu0 %v468
    %1621 = vmatpush1.msra.mxu0 %v467
    %1622 = vmatprep.subr.mxu0 %v472
    %1623 = vmatpush1.msra.mxu0 %v471
    %1624 = vmatprep.subr.mxu0 %v476
    %1625 = vmatpush1.msra.mxu0 %v475
    %1626 = vmatprep.subr.mxu0 0.0
    %1627 = vmatpush1.msra.mxu0 0.0
    %1628 = vmatprep.subr.mxu0 0.0
    %1629 = vmatpush1.msra.mxu0 0.0
    %1630 = vmatprep.subr.mxu0 0.0
    %1631 = vmatpush1.msra.mxu0 0.0
    %1632 = vmatprep.subr.mxu0 0.0
    %1633 = vmatpush1.msra.mxu0 0.0
    %1634 = vmatprep.subr.mxu0 0.0
    %1635 = vmatpush1.msra.mxu0 0.0
    %1636 = vmatprep.subr.mxu0 0.0
    %1637 = vmatpush1.msra.mxu0 0.0
    %1638 = vmatprep.subr.mxu0 0.0
    %1639 = vmatpush1.msra.mxu0 0.0
    %1640 = vmatprep.subr.mxu0 0.0
    %1641 = vmatpush1.msra.mxu0 0.0
    %1642 = vmatprep.subr.mxu0 0.0
    %1643 = vmatpush1.msra.mxu0 0.0
    %1644 = vmatprep.subr.mxu0 0.0
    %1645 = vmatpush1.msra.mxu0 0.0
    %1646 = vmatprep.subr.mxu0 0.0
    %1647 = vmatpush1.msra.mxu0 0.0
    %1648 = vmatprep.subr.mxu0 0.0
    %1649 = vmatpush1.msra.mxu0 0.0
    %1650 = vmatprep.subr.mxu0 0.0
    %1651 = vmatpush1.msra.mxu0 0.0
    %1652 = vmatprep.subr.mxu0 0.0
    %1653 = vmatpush1.msra.mxu0 0.0
    %1654 = vmatprep.subr.mxu0 0.0
    %1655 = vmatpush1.msra.mxu0 0.0
    %1656 = vmatprep.subr.mxu0 0.0
    %1657 = vmatpush1.msra.mxu0 0.0
    %1658 = vmatprep.mubr.f32.mxu0 0.0
    %1659 = vmatmul.mubr.f32.gmra.mrb[0].mxu0 %v1577
    %v1660 = vpop.f32.mrb[0].mxu0
    %v1661 = vadd.f32 0.0, %v1660
    %v1662 = vpop.f32.mrb[0].mxu0
    %v1663 = vadd.f32 0.0, %v1662
    %1664 = vdwg.mxu0
    %1665 = vmatprep.subr.mxu0 %v418
    %1666 = vmatpush1.msra.mxu0 %v417
    %1667 = vmatprep.subr.mxu0 %v422
    %1668 = vmatpush1.msra.mxu0 %v421
    %1669 = vmatprep.subr.mxu0 %v426
    %1670 = vmatpush1.msra.mxu0 %v425
    %1671 = vmatprep.subr.mxu0 %v430
    %1672 = vmatpush1.msra.mxu0 %v429
    %1673 = vmatprep.subr.mxu0 %v434
    %1674 = vmatpush1.msra.mxu0 %v433
    %1675 = vmatprep.subr.mxu0 %v438
    %1676 = vmatpush1.msra.mxu0 %v437
    %1677 = vmatprep.subr.mxu0 %v442
    %1678 = vmatpush1.msra.mxu0 %v441
    %1679 = vmatprep.subr.mxu0 %v446
    %1680 = vmatpush1.msra.mxu0 %v445
    %1681 = vmatprep.subr.mxu0 %v450
    %1682 = vmatpush1.msra.mxu0 %v449
    %1683 = vmatprep.subr.mxu0 %v454
    %1684 = vmatpush1.msra.mxu0 %v453
    %1685 = vmatprep.subr.mxu0 %v458
    %1686 = vmatpush1.msra.mxu0 %v457
    %1687 = vmatprep.subr.mxu0 %v462
    %1688 = vmatpush1.msra.mxu0 %v461
    %1689 = vmatprep.subr.mxu0 %v466
    %1690 = vmatpush1.msra.mxu0 %v465
    %1691 = vmatprep.subr.mxu0 %v470
    %1692 = vmatpush1.msra.mxu0 %v469
    %1693 = vmatprep.subr.mxu0 %v474
    %1694 = vmatpush1.msra.mxu0 %v473
    %1695 = vmatprep.subr.mxu0 %v478
    %1696 = vmatpush1.msra.mxu0 %v477
    %1697 = vmatprep.subr.mxu0 0.0
    %1698 = vmatpush1.msra.mxu0 0.0
    %1699 = vmatprep.subr.mxu0 0.0
    %1700 = vmatpush1.msra.mxu0 0.0
    %1701 = vmatprep.subr.mxu0 0.0
    %1702 = vmatpush1.msra.mxu0 0.0
    %1703 = vmatprep.subr.mxu0 0.0
    %1704 = vmatpush1.msra.mxu0 0.0
    %1705 = vmatprep.subr.mxu0 0.0
    %1706 = vmatpush1.msra.mxu0 0.0
    %1707 = vmatprep.subr.mxu0 0.0
    %1708 = vmatpush1.msra.mxu0 0.0
    %1709 = vmatprep.subr.mxu0 0.0
    %1710 = vmatpush1.msra.mxu0 0.0
    %1711 = vmatprep.subr.mxu0 0.0
    %1712 = vmatpush1.msra.mxu0 0.0
    %1713 = vmatprep.subr.mxu0 0.0
    %1714 = vmatpush1.msra.mxu0 0.0
    %1715 = vmatprep.subr.mxu0 0.0
    %1716 = vmatpush1.msra.mxu0 0.0
    %1717 = vmatprep.subr.mxu0 0.0
    %1718 = vmatpush1.msra.mxu0 0.0
    %1719 = vmatprep.subr.mxu0 0.0
    %1720 = vmatpush1.msra.mxu0 0.0
    %1721 = vmatprep.subr.mxu0 0.0
    %1722 = vmatpush1.msra.mxu0 0.0
    %1723 = vmatprep.subr.mxu0 0.0
    %1724 = vmatpush1.msra.mxu0 0.0
    %1725 = vmatprep.subr.mxu0 0.0
    %1726 = vmatpush1.msra.mxu0 0.0
    %1727 = vmatprep.subr.mxu0 0.0
    %1728 = vmatpush1.msra.mxu0 0.0
    %1729 = vmatprep.mubr.f32.mxu0 0.0
    %1730 = vmatmul.mubr.f32.gmra.mrb[0].mxu0 %v1577
    %v1731 = vpop.f32.mrb[0].mxu0
    %v1732 = vadd.f32 0.0, %v1731
    %v1733 = vpop.f32.mrb[0].mxu0
    %v1734 = vadd.f32 0.0, %v1733
    %1735 = vdwg.mxu0
    %v1736 = vadd.f32 %v1590, %v1661
    %v1737 = vadd.f32 %v1591, %v1663
    %v1738 = vadd.f32 %v1592, %v1732
    %v1739 = vadd.f32 %v1593, %v1734
    %v1740 = vxor.u32 %v1736, 2147483648
    %v1741 = vmul.f32 %v1740, 1.442695
    %v1742 = vpow.pop %v1741
    %v1743 = vadd.f32 %v1742, 1.0
    %v1744 = vrcp.pop %v1743
    %v1745 = vmul.f32 1.0, %v1744
    %v1746 = vxor.u32 %v1737, 2147483648
    %v1747 = vmul.f32 %v1746, 1.442695
    %v1748 = vpow.pop %v1747
    %v1749 = vadd.f32 %v1748, 1.0
    %v1750 = vrcp.pop %v1749
    %v1751 = vmul.f32 1.0, %v1750
    %v1752 = vtanh.pop %v1738
    %v1753 = vxor.u32 %v1739, 2147483648
    %v1754 = vmul.f32 %v1753, 1.442695
    %v1755 = vpow.pop %v1754
    %v1756 = vadd.f32 %v1755, 1.0
    %v1757 = vrcp.pop %v1756
    %v1758 = vmul.f32 1.0, %v1757
    %v1759 = vmul.f32 %v1751, %v1575
    %v1760 = vmul.f32 %v1745, %v1752
    %v1761 = vadd.f32 %v1759, %v1760
    %v1762 = vtanh.pop %v1761
    %v1763 = vmul.f32 %v1758, %v1762
    %s1764 = scalar_lea.vmem %s1, 48
    %v1765 = vld [vmem:[%s1764] sm:$0xff]
    %1767 = vset.pattern.permute.xlu0 0
    %1768 = vperm.xlu0 %1767, %v1765
    %v1769 = vpop.permute.xlu0 %1768
    %v1771 = vmul.f32 %v1769, %v1763
    %v1772 = vadd.f32 %v1586, %v1771
    %s1773 = smul.u32 7, 4
    %s1774 = smul.addr %s1773, 8
    %s1775 = scalar_lea.vmem [#allocation2], %s1774
    %v1776 = vld [vmem:[%s1775] sm:$0xff]
    %v1777 = vld [vmem:[%s1775 + $0x8] sm:$0xff]
    %v1778 = vld [vmem:[%s1775 + $0x10] sm:$0xff]
    %v1779 = vld [vmem:[%s1775 + $0x18] sm:$0xff]
    %1780 = vmatprep.subr.mxu0 %v416
    %1781 = vmatpush1.msra.mxu0 %v415
    %1782 = vmatprep.subr.mxu0 %v420
    %1783 = vmatpush1.msra.mxu0 %v419
    %1784 = vmatprep.subr.mxu0 %v424
    %1785 = vmatpush1.msra.mxu0 %v423
    %1786 = vmatprep.subr.mxu0 %v428
    %1787 = vmatpush1.msra.mxu0 %v427
    %1788 = vmatprep.subr.mxu0 %v432
    %1789 = vmatpush1.msra.mxu0 %v431
    %1790 = vmatprep.subr.mxu0 %v436
    %1791 = vmatpush1.msra.mxu0 %v435
    %1792 = vmatprep.subr.mxu0 %v440
    %1793 = vmatpush1.msra.mxu0 %v439
    %1794 = vmatprep.subr.mxu0 %v444
    %1795 = vmatpush1.msra.mxu0 %v443
    %1796 = vmatprep.subr.mxu0 %v448
    %1797 = vmatpush1.msra.mxu0 %v447
    %1798 = vmatprep.subr.mxu0 %v452
    %1799 = vmatpush1.msra.mxu0 %v451
    %1800 = vmatprep.subr.mxu0 %v456
    %1801 = vmatpush1.msra.mxu0 %v455
    %1802 = vmatprep.subr.mxu0 %v460
    %1803 = vmatpush1.msra.mxu0 %v459
    %1804 = vmatprep.subr.mxu0 %v464
    %1805 = vmatpush1.msra.mxu0 %v463
    %1806 = vmatprep.subr.mxu0 %v468
    %1807 = vmatpush1.msra.mxu0 %v467
    %1808 = vmatprep.subr.mxu0 %v472
    %1809 = vmatpush1.msra.mxu0 %v471
    %1810 = vmatprep.subr.mxu0 %v476
    %1811 = vmatpush1.msra.mxu0 %v475
    %1812 = vmatprep.subr.mxu0 0.0
    %1813 = vmatpush1.msra.mxu0 0.0
    %1814 = vmatprep.subr.mxu0 0.0
    %1815 = vmatpush1.msra.mxu0 0.0
    %1816 = vmatprep.subr.mxu0 0.0
    %1817 = vmatpush1.msra.mxu0 0.0
    %1818 = vmatprep.subr.mxu0 0.0
    %1819 = vmatpush1.msra.mxu0 0.0
    %1820 = vmatprep.subr.mxu0 0.0
    %1821 = vmatpush1.msra.mxu0 0.0
    %1822 = vmatprep.subr.mxu0 0.0
    %1823 = vmatpush1.msra.mxu0 0.0
    %1824 = vmatprep.subr.mxu0 0.0
    %1825 = vmatpush1.msra.mxu0 0.0
    %1826 = vmatprep.subr.mxu0 0.0
    %1827 = vmatpush1.msra.mxu0 0.0
    %1828 = vmatprep.subr.mxu0 0.0
    %1829 = vmatpush1.msra.mxu0 0.0
    %1830 = vmatprep.subr.mxu0 0.0
    %1831 = vmatpush1.msra.mxu0 0.0
    %1832 = vmatprep.subr.mxu0 0.0
    %1833 = vmatpush1.msra.mxu0 0.0
    %1834 = vmatprep.subr.mxu0 0.0
    %1835 = vmatpush1.msra.mxu0 0.0
    %1836 = vmatprep.subr.mxu0 0.0
    %1837 = vmatpush1.msra.mxu0 0.0
    %1838 = vmatprep.subr.mxu0 0.0
    %1839 = vmatpush1.msra.mxu0 0.0
    %1840 = vmatprep.subr.mxu0 0.0
    %1841 = vmatpush1.msra.mxu0 0.0
    %1842 = vmatprep.subr.mxu0 0.0
    %1843 = vmatpush1.msra.mxu0 0.0
    %1844 = vmatprep.mubr.f32.mxu0 0.0
    %1845 = vmatmul.mubr.f32.gmra.mrb[0].mxu0 %v1763
    %v1846 = vpop.f32.mrb[0].mxu0
    %v1847 = vadd.f32 0.0, %v1846
    %v1848 = vpop.f32.mrb[0].mxu0
    %v1849 = vadd.f32 0.0, %v1848
    %1850 = vdwg.mxu0
    %1851 = vmatprep.subr.mxu0 %v418
    %1852 = vmatpush1.msra.mxu0 %v417
    %1853 = vmatprep.subr.mxu0 %v422
    %1854 = vmatpush1.msra.mxu0 %v421
    %1855 = vmatprep.subr.mxu0 %v426
    %1856 = vmatpush1.msra.mxu0 %v425
    %1857 = vmatprep.subr.mxu0 %v430
    %1858 = vmatpush1.msra.mxu0 %v429
    %1859 = vmatprep.subr.mxu0 %v434
    %1860 = vmatpush1.msra.mxu0 %v433
    %1861 = vmatprep.subr.mxu0 %v438
    %1862 = vmatpush1.msra.mxu0 %v437
    %1863 = vmatprep.subr.mxu0 %v442
    %1864 = vmatpush1.msra.mxu0 %v441
    %1865 = vmatprep.subr.mxu0 %v446
    %1866 = vmatpush1.msra.mxu0 %v445
    %1867 = vmatprep.subr.mxu0 %v450
    %1868 = vmatpush1.msra.mxu0 %v449
    %1869 = vmatprep.subr.mxu0 %v454
    %1870 = vmatpush1.msra.mxu0 %v453
    %1871 = vmatprep.subr.mxu0 %v458
    %1872 = vmatpush1.msra.mxu0 %v457
    %1873 = vmatprep.subr.mxu0 %v462
    %1874 = vmatpush1.msra.mxu0 %v461
    %1875 = vmatprep.subr.mxu0 %v466
    %1876 = vmatpush1.msra.mxu0 %v465
    %1877 = vmatprep.subr.mxu0 %v470
    %1878 = vmatpush1.msra.mxu0 %v469
    %1879 = vmatprep.subr.mxu0 %v474
    %1880 = vmatpush1.msra.mxu0 %v473
    %1881 = vmatprep.subr.mxu0 %v478
    %1882 = vmatpush1.msra.mxu0 %v477
    %1883 = vmatprep.subr.mxu0 0.0
    %1884 = vmatpush1.msra.mxu0 0.0
    %1885 = vmatprep.subr.mxu0 0.0
    %1886 = vmatpush1.msra.mxu0 0.0
    %1887 = vmatprep.subr.mxu0 0.0
    %1888 = vmatpush1.msra.mxu0 0.0
    %1889 = vmatprep.subr.mxu0 0.0
    %1890 = vmatpush1.msra.mxu0 0.0
    %1891 = vmatprep.subr.mxu0 0.0
    %1892 = vmatpush1.msra.mxu0 0.0
    %1893 = vmatprep.subr.mxu0 0.0
    %1894 = vmatpush1.msra.mxu0 0.0
    %1895 = vmatprep.subr.mxu0 0.0
    %1896 = vmatpush1.msra.mxu0 0.0
    %1897 = vmatprep.subr.mxu0 0.0
    %1898 = vmatpush1.msra.mxu0 0.0
    %1899 = vmatprep.subr.mxu0 0.0
    %1900 = vmatpush1.msra.mxu0 0.0
    %1901 = vmatprep.subr.mxu0 0.0
    %1902 = vmatpush1.msra.mxu0 0.0
    %1903 = vmatprep.subr.mxu0 0.0
    %1904 = vmatpush1.msra.mxu0 0.0
    %1905 = vmatprep.subr.mxu0 0.0
    %1906 = vmatpush1.msra.mxu0 0.0
    %1907 = vmatprep.subr.mxu0 0.0
    %1908 = vmatpush1.msra.mxu0 0.0
    %1909 = vmatprep.subr.mxu0 0.0
    %1910 = vmatpush1.msra.mxu0 0.0
    %1911 = vmatprep.subr.mxu0 0.0
    %1912 = vmatpush1.msra.mxu0 0.0
    %1913 = vmatprep.subr.mxu0 0.0
    %1914 = vmatpush1.msra.mxu0 0.0
    %1915 = vmatprep.mubr.f32.mxu0 0.0
    %1916 = vmatmul.mubr.f32.gmra.mrb[0].mxu0 %v1763
    %v1917 = vpop.f32.mrb[0].mxu0
    %v1918 = vadd.f32 0.0, %v1917
    %v1919 = vpop.f32.mrb[0].mxu0
    %v1920 = vadd.f32 0.0, %v1919
    %1921 = vdwg.mxu0
    %v1922 = vadd.f32 %v1776, %v1847
    %v1923 = vadd.f32 %v1777, %v1849
    %v1924 = vadd.f32 %v1778, %v1918
    %v1925 = vadd.f32 %v1779, %v1920
    %v1926 = vxor.u32 %v1922, 2147483648
    %v1927 = vmul.f32 %v1926, 1.442695
    %v1928 = vpow.pop %v1927
    %v1929 = vadd.f32 %v1928, 1.0
    %v1930 = vrcp.pop %v1929
    %v1931 = vmul.f32 1.0, %v1930
    %v1932 = vxor.u32 %v1923, 2147483648
    %v1933 = vmul.f32 %v1932, 1.442695
    %v1934 = vpow.pop %v1933
    %v1935 = vadd.f32 %v1934, 1.0
    %v1936 = vrcp.pop %v1935
    %v1937 = vmul.f32 1.0, %v1936
    %v1938 = vtanh.pop %v1924
    %v1939 = vxor.u32 %v1925, 2147483648
    %v1940 = vmul.f32 %v1939, 1.442695
    %v1941 = vpow.pop %v1940
    %v1942 = vadd.f32 %v1941, 1.0
    %v1943 = vrcp.pop %v1942
    %v1944 = vmul.f32 1.0, %v1943
    %v1945 = vmul.f32 %v1937, %v1761
    %v1946 = vmul.f32 %v1931, %v1938
    %v1947 = vadd.f32 %v1945, %v1946
    %v1948 = vtanh.pop %v1947
    %v1949 = vmul.f32 %v1944, %v1948
    %s1950 = scalar_lea.vmem %s1, 56
    %v1951 = vld [vmem:[%s1950] sm:$0xff]
    %1953 = vset.pattern.permute.xlu0 0
    %1954 = vperm.xlu0 %1953, %v1951
    %v1955 = vpop.permute.xlu0 %1954
    %v1957 = vmul.f32 %v1955, %v1949
    %v1958 = vadd.f32 %v1772, %v1957
    %v1959 = vld [vmem:[%s5] sm:$0xff]
    %v1960 = vld [vmem:[%s5 + $0x8] sm:$0xff]
    %v1961 = vld [vmem:[%s5 + $0x10] sm:$0xff]
    %v1962 = vld [vmem:[%s5 + $0x18] sm:$0xff]
    %v1963 = vld [vmem:[%s5 + $0x20] sm:$0xff]
    %v1964 = vld [vmem:[%s5 + $0x28] sm:$0xff]
    %v1965 = vld [vmem:[%s5 + $0x30] sm:$0xff]
    %v1966 = vld [vmem:[%s5 + $0x38] sm:$0xff]
    %v1967 = vld [vmem:[%s5 + $0x40] sm:$0xff]
    %v1968 = vld [vmem:[%s5 + $0x48] sm:$0xff]
    %v1969 = vld [vmem:[%s5 + $0x50] sm:$0xff]
    %v1970 = vld [vmem:[%s5 + $0x58] sm:$0xff]
    %v1971 = vld [vmem:[%s5 + $0x60] sm:$0xff]
    %v1972 = vld [vmem:[%s5 + $0x68] sm:$0xff]
    %v1973 = vld [vmem:[%s5 + $0x70] sm:$0xff]
    %v1974 = vld [vmem:[%s5 + $0x78] sm:$0xff]
    %v1975 = vld [vmem:[%s6] sm:$0x1]
    %v1977 = vlaneseq
    %v1978 = vshrl.u32 %v1977, 7
    %v1979 = vsub.s32 0, %v1978
    %v1980 = vrot.slane %v1975, %v1979
    %1982 = vmatprep.subr.mxu0 0.0
    %1983 = vmatpush1.msra.mxu0 %v1959
    %1984 = vmatprep.subr.mxu0 0.0
    %1985 = vmatpush1.msra.mxu0 %v1960
    %1986 = vmatprep.subr.mxu0 0.0
    %1987 = vmatpush1.msra.mxu0 %v1961
    %1988 = vmatprep.subr.mxu0 0.0
    %1989 = vmatpush1.msra.mxu0 %v1962
    %1990 = vmatprep.subr.mxu0 0.0
    %1991 = vmatpush1.msra.mxu0 %v1963
    %1992 = vmatprep.subr.mxu0 0.0
    %1993 = vmatpush1.msra.mxu0 %v1964
    %1994 = vmatprep.subr.mxu0 0.0
    %1995 = vmatpush1.msra.mxu0 %v1965
    %1996 = vmatprep.subr.mxu0 0.0
    %1997 = vmatpush1.msra.mxu0 %v1966
    %1998 = vmatprep.subr.mxu0 0.0
    %1999 = vmatpush1.msra.mxu0 %v1967
    %2000 = vmatprep.subr.mxu0 0.0
    %2001 = vmatpush1.msra.mxu0 %v1968
    %2002 = vmatprep.subr.mxu0 0.0
    %2003 = vmatpush1.msra.mxu0 %v1969
    %2004 = vmatprep.subr.mxu0 0.0
    %2005 = vmatpush1.msra.mxu0 %v1970
    %2006 = vmatprep.subr.mxu0 0.0
    %2007 = vmatpush1.msra.mxu0 %v1971
    %2008 = vmatprep.subr.mxu0 0.0
    %2009 = vmatpush1.msra.mxu0 %v1972
    %2010 = vmatprep.subr.mxu0 0.0
    %2011 = vmatpush1.msra.mxu0 %v1973
    %2012 = vmatprep.subr.mxu0 0.0
    %2013 = vmatpush1.msra.mxu0 %v1974
    %2014 = vmatprep.subr.mxu0 0.0
    %2015 = vmatpush1.msra.mxu0 0.0
    %2016 = vmatprep.subr.mxu0 0.0
    %2017 = vmatpush1.msra.mxu0 0.0
    %2018 = vmatprep.subr.mxu0 0.0
    %2019 = vmatpush1.msra.mxu0 0.0
    %2020 = vmatprep.subr.mxu0 0.0
    %2021 = vmatpush1.msra.mxu0 0.0
    %2022 = vmatprep.subr.mxu0 0.0
    %2023 = vmatpush1.msra.mxu0 0.0
    %2024 = vmatprep.subr.mxu0 0.0
    %2025 = vmatpush1.msra.mxu0 0.0
    %2026 = vmatprep.subr.mxu0 0.0
    %2027 = vmatpush1.msra.mxu0 0.0
    %2028 = vmatprep.subr.mxu0 0.0
    %2029 = vmatpush1.msra.mxu0 0.0
    %2030 = vmatprep.subr.mxu0 0.0
    %2031 = vmatpush1.msra.mxu0 0.0
    %2032 = vmatprep.subr.mxu0 0.0
    %2033 = vmatpush1.msra.mxu0 0.0
    %2034 = vmatprep.subr.mxu0 0.0
    %2035 = vmatpush1.msra.mxu0 0.0
    %2036 = vmatprep.subr.mxu0 0.0
    %2037 = vmatpush1.msra.mxu0 0.0
    %2038 = vmatprep.subr.mxu0 0.0
    %2039 = vmatpush1.msra.mxu0 0.0
    %2040 = vmatprep.subr.mxu0 0.0
    %2041 = vmatpush1.msra.mxu0 0.0
    %2042 = vmatprep.subr.mxu0 0.0
    %2043 = vmatpush1.msra.mxu0 0.0
    %2044 = vmatprep.subr.mxu0 0.0
    %2045 = vmatpush1.msra.mxu0 0.0
    %2046 = vmatprep.mubr.f32.mxu0 0.0
    %2047 = vmatmul.mubr.f32.gmra.mrb[0].mxu0 %v1958
    %v2048 = vpop.f32.mrb[0].mxu0
    %v2049 = vadd.f32 %v1980, %v2048
    %v2050 = vpop.f32.mrb[0].mxu0
    %2051 = vdwg.mxu0
    %v2052 = vtanh.pop %v2049
    %v2053 = vld [vmem:[#allocation5] sm:$0xff]
    %v2054 = vld [vmem:[#allocation5 + $0x8] sm:$0xff]
    %v2055 = vld [vmem:[#allocation5 + $0x10] sm:$0xff]
    %v2056 = vld [vmem:[#allocation5 + $0x18] sm:$0xff]
    %v2057 = vld [vmem:[#allocation5 + $0x20] sm:$0xff]
    %v2058 = vld [vmem:[#allocation5 + $0x28] sm:$0xff]
    %v2059 = vld [vmem:[#allocation5 + $0x30] sm:$0xff]
    %v2060 = vld [vmem:[#allocation5 + $0x38] sm:$0xff]
    %v2061 = vld [vmem:[#allocation5 + $0x40] sm:$0xff]
    %v2062 = vld [vmem:[#allocation5 + $0x48] sm:$0xff]
    %v2063 = vld [vmem:[#allocation5 + $0x50] sm:$0xff]
    %v2064 = vld [vmem:[#allocation5 + $0x58] sm:$0xff]
    %v2065 = vld [vmem:[#allocation5 + $0x60] sm:$0xff]
    %v2066 = vld [vmem:[#allocation5 + $0x68] sm:$0xff]
    %v2067 = vld [vmem:[#allocation5 + $0x70] sm:$0xff]
    %v2068 = vld [vmem:[#allocation5 + $0x78] sm:$0xff]
    %v2069 = vld [vmem:[%s8] sm:$0x1]
    %v2071 = vlaneseq
    %v2072 = vshrl.u32 %v2071, 7
    %v2073 = vsub.s32 0, %v2072
    %v2074 = vrot.slane %v2069, %v2073
    %2076 = vmatprep.subr.mxu0 0.0
    %2077 = vmatpush1.msra.mxu0 %v2053
    %2078 = vmatprep.subr.mxu0 0.0
    %2079 = vmatpush1.msra.mxu0 %v2054
    %2080 = vmatprep.subr.mxu0 0.0
    %2081 = vmatpush1.msra.mxu0 %v2055
    %2082 = vmatprep.subr.mxu0 0.0
    %2083 = vmatpush1.msra.mxu0 %v2056
    %2084 = vmatprep.subr.mxu0 0.0
    %2085 = vmatpush1.msra.mxu0 %v2057
    %2086 = vmatprep.subr.mxu0 0.0
    %2087 = vmatpush1.msra.mxu0 %v2058
    %2088 = vmatprep.subr.mxu0 0.0
    %2089 = vmatpush1.msra.mxu0 %v2059
    %2090 = vmatprep.subr.mxu0 0.0
    %2091 = vmatpush1.msra.mxu0 %v2060
    %2092 = vmatprep.subr.mxu0 0.0
    %2093 = vmatpush1.msra.mxu0 %v2061
    %2094 = vmatprep.subr.mxu0 0.0
    %2095 = vmatpush1.msra.mxu0 %v2062
    %2096 = vmatprep.subr.mxu0 0.0
    %2097 = vmatpush1.msra.mxu0 %v2063
    %2098 = vmatprep.subr.mxu0 0.0
    %2099 = vmatpush1.msra.mxu0 %v2064
    %2100 = vmatprep.subr.mxu0 0.0
    %2101 = vmatpush1.msra.mxu0 %v2065
    %2102 = vmatprep.subr.mxu0 0.0
    %2103 = vmatpush1.msra.mxu0 %v2066
    %2104 = vmatprep.subr.mxu0 0.0
    %2105 = vmatpush1.msra.mxu0 %v2067
    %2106 = vmatprep.subr.mxu0 0.0
    %2107 = vmatpush1.msra.mxu0 %v2068
    %2108 = vmatprep.subr.mxu0 0.0
    %2109 = vmatpush1.msra.mxu0 0.0
    %2110 = vmatprep.subr.mxu0 0.0
    %2111 = vmatpush1.msra.mxu0 0.0
    %2112 = vmatprep.subr.mxu0 0.0
    %2113 = vmatpush1.msra.mxu0 0.0
    %2114 = vmatprep.subr.mxu0 0.0
    %2115 = vmatpush1.msra.mxu0 0.0
    %2116 = vmatprep.subr.mxu0 0.0
    %2117 = vmatpush1.msra.mxu0 0.0
    %2118 = vmatprep.subr.mxu0 0.0
    %2119 = vmatpush1.msra.mxu0 0.0
    %2120 = vmatprep.subr.mxu0 0.0
    %2121 = vmatpush1.msra.mxu0 0.0
    %2122 = vmatprep.subr.mxu0 0.0
    %2123 = vmatpush1.msra.mxu0 0.0
    %2124 = vmatprep.subr.mxu0 0.0
    %2125 = vmatpush1.msra.mxu0 0.0
    %2126 = vmatprep.subr.mxu0 0.0
    %2127 = vmatpush1.msra.mxu0 0.0
    %2128 = vmatprep.subr.mxu0 0.0
    %2129 = vmatpush1.msra.mxu0 0.0
    %2130 = vmatprep.subr.mxu0 0.0
    %2131 = vmatpush1.msra.mxu0 0.0
    %2132 = vmatprep.subr.mxu0 0.0
    %2133 = vmatpush1.msra.mxu0 0.0
    %2134 = vmatprep.subr.mxu0 0.0
    %2135 = vmatpush1.msra.mxu0 0.0
    %2136 = vmatprep.subr.mxu0 0.0
    %2137 = vmatpush1.msra.mxu0 0.0
    %2138 = vmatprep.subr.mxu0 0.0
    %2139 = vmatpush1.msra.mxu0 0.0
    %2140 = vmatprep.mubr.f32.mxu0 0.0
    %2141 = vmatmul.mubr.f32.gmra.mrb[0].mxu0 %v2052
    %v2142 = vpop.f32.mrb[0].mxu0
    %v2143 = vadd.f32 %v2074, %v2142
    %v2144 = vpop.f32.mrb[0].mxu0
    %2145 = vdwg.mxu0
    %v2146 = vtanh.pop %v2143
    %v2147 = vld [vmem:[#allocation7] sm:$0xff]
    %v2148 = vld [vmem:[#allocation7 + $0x8] sm:$0xff]
    %v2149 = vld [vmem:[#allocation7 + $0x10] sm:$0xff]
    %v2150 = vld [vmem:[#allocation7 + $0x18] sm:$0xff]
    %v2151 = vld [vmem:[#allocation7 + $0x20] sm:$0xff]
    %v2152 = vld [vmem:[#allocation7 + $0x28] sm:$0xff]
    %v2153 = vld [vmem:[#allocation7 + $0x30] sm:$0xff]
    %v2154 = vld [vmem:[#allocation7 + $0x38] sm:$0xff]
    %v2155 = vld [vmem:[#allocation7 + $0x40] sm:$0xff]
    %v2156 = vld [vmem:[#allocation7 + $0x48] sm:$0xff]
    %v2157 = vld [vmem:[#allocation7 + $0x50] sm:$0xff]
    %v2158 = vld [vmem:[#allocation7 + $0x58] sm:$0xff]
    %v2159 = vld [vmem:[#allocation7 + $0x60] sm:$0xff]
    %v2160 = vld [vmem:[#allocation7 + $0x68] sm:$0xff]
    %v2161 = vld [vmem:[#allocation7 + $0x70] sm:$0xff]
    %v2162 = vld [vmem:[#allocation7 + $0x78] sm:$0xff]
    %v2163 = vld [vmem:[%s10] sm:$0x1]
    %v2165 = vlaneseq
    %v2166 = vshrl.u32 %v2165, 7
    %v2167 = vsub.s32 0, %v2166
    %v2168 = vrot.slane %v2163, %v2167
    %2170 = vmatprep.subr.mxu0 0.0
    %2171 = vmatpush1.msra.mxu0 %v2147
    %2172 = vmatprep.subr.mxu0 0.0
    %2173 = vmatpush1.msra.mxu0 %v2148
    %2174 = vmatprep.subr.mxu0 0.0
    %2175 = vmatpush1.msra.mxu0 %v2149
    %2176 = vmatprep.subr.mxu0 0.0
    %2177 = vmatpush1.msra.mxu0 %v2150
    %2178 = vmatprep.subr.mxu0 0.0
    %2179 = vmatpush1.msra.mxu0 %v2151
    %2180 = vmatprep.subr.mxu0 0.0
    %2181 = vmatpush1.msra.mxu0 %v2152
    %2182 = vmatprep.subr.mxu0 0.0
    %2183 = vmatpush1.msra.mxu0 %v2153
    %2184 = vmatprep.subr.mxu0 0.0
    %2185 = vmatpush1.msra.mxu0 %v2154
    %2186 = vmatprep.subr.mxu0 0.0
    %2187 = vmatpush1.msra.mxu0 %v2155
    %2188 = vmatprep.subr.mxu0 0.0
    %2189 = vmatpush1.msra.mxu0 %v2156
    %2190 = vmatprep.subr.mxu0 0.0
    %2191 = vmatpush1.msra.mxu0 %v2157
    %2192 = vmatprep.subr.mxu0 0.0
    %2193 = vmatpush1.msra.mxu0 %v2158
    %2194 = vmatprep.subr.mxu0 0.0
    %2195 = vmatpush1.msra.mxu0 %v2159
    %2196 = vmatprep.subr.mxu0 0.0
    %2197 = vmatpush1.msra.mxu0 %v2160
    %2198 = vmatprep.subr.mxu0 0.0
    %2199 = vmatpush1.msra.mxu0 %v2161
    %2200 = vmatprep.subr.mxu0 0.0
    %2201 = vmatpush1.msra.mxu0 %v2162
    %2202 = vmatprep.subr.mxu0 0.0
    %2203 = vmatpush1.msra.mxu0 0.0
    %2204 = vmatprep.subr.mxu0 0.0
    %2205 = vmatpush1.msra.mxu0 0.0
    %2206 = vmatprep.subr.mxu0 0.0
    %2207 = vmatpush1.msra.mxu0 0.0
    %2208 = vmatprep.subr.mxu0 0.0
    %2209 = vmatpush1.msra.mxu0 0.0
    %2210 = vmatprep.subr.mxu0 0.0
    %2211 = vmatpush1.msra.mxu0 0.0
    %2212 = vmatprep.subr.mxu0 0.0
    %2213 = vmatpush1.msra.mxu0 0.0
    %2214 = vmatprep.subr.mxu0 0.0
    %2215 = vmatpush1.msra.mxu0 0.0
    %2216 = vmatprep.subr.mxu0 0.0
    %2217 = vmatpush1.msra.mxu0 0.0
    %2218 = vmatprep.subr.mxu0 0.0
    %2219 = vmatpush1.msra.mxu0 0.0
    %2220 = vmatprep.subr.mxu0 0.0
    %2221 = vmatpush1.msra.mxu0 0.0
    %2222 = vmatprep.subr.mxu0 0.0
    %2223 = vmatpush1.msra.mxu0 0.0
    %2224 = vmatprep.subr.mxu0 0.0
    %2225 = vmatpush1.msra.mxu0 0.0
    %2226 = vmatprep.subr.mxu0 0.0
    %2227 = vmatpush1.msra.mxu0 0.0
    %2228 = vmatprep.subr.mxu0 0.0
    %2229 = vmatpush1.msra.mxu0 0.0
    %2230 = vmatprep.subr.mxu0 0.0
    %2231 = vmatpush1.msra.mxu0 0.0
    %2232 = vmatprep.subr.mxu0 0.0
    %2233 = vmatpush1.msra.mxu0 0.0
    %2234 = vmatprep.mubr.f32.mxu0 0.0
    %2235 = vmatmul.mubr.f32.gmra.mrb[0].mxu0 %v2146
    %v2236 = vpop.f32.mrb[0].mxu0
    %v2237 = vadd.f32 %v2168, %v2236
    %v2238 = vpop.f32.mrb[0].mxu0
    %2239 = vdwg.mxu0
    %v2240 = vxor.u32 %v2237, 2147483648
    %v2241 = vmul.f32 %v2240, 1.442695
    %v2242 = vpow.pop %v2241
    %v2243 = vadd.f32 %v2242, 1.0
    %v2244 = vrcp.pop %v2243
    %v2245 = vmul.f32 1.0, %v2244
    %2246 = vst [vmem:[%s11] sm:$0xff] %v2245
    // Predicated region
    $region58: #{rnnet_forward.1} parent=1 // pred_check
      _
    $region59: #{rnnet_forward.1} parent=1 // pred_check_branch
      %2248 = sbr.rel (0) target = $region61
    $region60: #{rnnet_forward.1} parent=1 // pred_region
      _
    $region61: #{rnnet_forward.1} parent=1 // pred_fallthru
      _
    // Predicated region
    $region62: #{rnnet_forward.1} parent=1 // pred_check
      _
    $region63: #{rnnet_forward.1} parent=1 // pred_check_branch
      %2250 = sbr.rel (0) target = $region65
    $region64: #{rnnet_forward.1} parent=1 // pred_region
      _
    $region65: #{rnnet_forward.1} parent=1 // pred_fallthru
      _
    %2251 = vsyncpa [#allocation4], 1
    %2252 = vsyncpa [#allocation6], 1

</llo_original>
